<compile_context>
chip_gen: v5e
topology: v5e:2x2
jax: 0.10.0
libtpu: 0.0.40
codegen_flags: <defaults>
</compile_context>

<pallas_src>
import math
import functools

import jax
import jax.numpy as jnp
from jax import lax
from jax.experimental import pallas as pl
from jax.experimental.pallas import tpu as pltpu


NEG = -1e30                  # stand-in for -inf in additive masks
WDTYPE = jnp.bfloat16        # matmul weight storage dtype
ADTYPE = jnp.bfloat16        # inter-kernel activation dtype
LN_EPS = 1e-5


def _pick_tile(dim, candidates):
    """Largest candidate that divides dim; otherwise the full dim (small shapes)."""
    for c in candidates:
        if c <= dim and dim % c == 0:
            return c
    return dim


@functools.lru_cache(maxsize=None)
def _vmem_limit_bytes():
    """Generation-aware scoped-VMEM budget (~3/4 of physical, capped at 100 MiB)."""
    try:
        cap = getattr(pltpu.get_tpu_info(), "vmem_capacity_bytes", None)
    except Exception:
        cap = None
    if not cap:
        return 48 * 1024 * 1024          # safe fallback (fits v7x's 64 MiB)
    return int(min((cap * 3) // 4, 100 * 1024 * 1024))


def _mosaic_params(semantics):
    return pltpu.CompilerParams(dimension_semantics=semantics,
                                vmem_limit_bytes=_vmem_limit_bytes())


def _layernorm_rows(v, g, b, eps=LN_EPS):
    """f32 LayerNorm over the last dim. v: [tm, E] f32, g/b: [1, E] f32."""
    mu = jnp.mean(v, axis=-1, keepdims=True)
    var = jnp.mean(jnp.square(v - mu), axis=-1, keepdims=True)
    return (v - mu) * lax.rsqrt(var + eps) * g + b


# ----------------------------------------------------------------------------
# Pallas kernels
# ----------------------------------------------------------------------------

def linear_pallas(x, w, b, out_dtype=ADTYPE):
    """y = x @ w + b. x: [M, K] bf16, w: [K, N] bf16, b: [N] f32."""
    M, K = x.shape
    Kw, N = w.shape
    assert Kw == K
    tm = _pick_tile(M, (512, 256, 128, 64, 32, 16))
    tn = _pick_tile(N, (512, 256, 128))
    tk = _pick_tile(K, (512, 256, 128))
    gm, gn, gk = M // tm, N // tn, K // tk

    if gk == 1:
        # K fits in one block: write the dot straight to the output tile
        # (no f32 accumulator round-trip).
        def kernel(x_ref, w_ref, b_ref, o_ref):
            y = jnp.dot(x_ref[...], w_ref[...],
                        preferred_element_type=jnp.float32) + b_ref[...]
            o_ref[...] = y.astype(o_ref.dtype)
        scratch = []
    else:
        def kernel(x_ref, w_ref, b_ref, o_ref, acc_ref):
            @pl.when(pl.program_id(2) == 0)
            def _init():
                acc_ref[...] = jnp.zeros_like(acc_ref)

            acc_ref[...] += jnp.dot(x_ref[...], w_ref[...],
                                    preferred_element_type=jnp.float32)

            @pl.when(pl.program_id(2) == gk - 1)
            def _fin():
                o_ref[...] = (acc_ref[...] + b_ref[...]).astype(o_ref.dtype)
        scratch = [pltpu.VMEM((tm, tn), jnp.float32)]

    return pl.pallas_call(
        kernel,
        out_shape=jax.ShapeDtypeStruct((M, N), out_dtype),
        grid_spec=pltpu.PrefetchScalarGridSpec(
            num_scalar_prefetch=0,
            grid=(gm, gn, gk),
            in_specs=[
                pl.BlockSpec((tm, tk), lambda i, j, k: (i, k)),
                pl.BlockSpec((tk, tn), lambda i, j, k: (k, j)),
                pl.BlockSpec((1, tn), lambda i, j, k: (0, j)),
            ],
            out_specs=pl.BlockSpec((tm, tn), lambda i, j, k: (i, j)),
            scratch_shapes=scratch,
        ),
        compiler_params=_mosaic_params(("parallel", "parallel", "arbitrary")),
    )(x, w, b.reshape(1, N))


def linear_add_ln_pallas(x, w, b, res, gamma, beta):
    """LayerNorm(res + x @ w + b), fused matmul epilogue.

    x: [M, K] bf16, w: [K, E] bf16, b: [E] f32, res: [M, E] bf16.
    Output [M, E] bf16.  Full E per output tile so LN sees whole rows.
    """
    M, K = x.shape
    E = w.shape[1]
    tm = _pick_tile(M, (256, 128, 64, 32, 16))
    tk = _pick_tile(K, (512, 256, 128))
    gm, gk = M // tm, K // tk

    if gk == 1:
        def kernel(x_ref, w_ref, b_ref, r_ref, g_ref, bt_ref, o_ref):
            y = jnp.dot(x_ref[...], w_ref[...],
                        preferred_element_type=jnp.float32) + b_ref[...]
            v = y + r_ref[...].astype(jnp.float32)
            o_ref[...] = _layernorm_rows(v, g_ref[...], bt_ref[...]).astype(o_ref.dtype)
        scratch = []
    else:
        def kernel(x_ref, w_ref, b_ref, r_ref, g_ref, bt_ref, o_ref, acc_ref):
            k = pl.program_id(1)

            @pl.when(k == 0)
            def _init():
                acc_ref[...] = jnp.zeros_like(acc_ref)

            acc_ref[...] += jnp.dot(x_ref[...], w_ref[...],
                                    preferred_element_type=jnp.float32)

            @pl.when(k == gk - 1)
            def _fin():
                v = acc_ref[...] + b_ref[...] + r_ref[...].astype(jnp.float32)
                o_ref[...] = _layernorm_rows(v, g_ref[...], bt_ref[...]).astype(o_ref.dtype)
        scratch = [pltpu.VMEM((tm, E), jnp.float32)]

    return pl.pallas_call(
        kernel,
        out_shape=jax.ShapeDtypeStruct((M, E), ADTYPE),
        grid_spec=pltpu.PrefetchScalarGridSpec(
            num_scalar_prefetch=0,
            grid=(gm, gk),
            in_specs=[
                pl.BlockSpec((tm, tk), lambda i, k: (i, k)),
                pl.BlockSpec((tk, E), lambda i, k: (k, 0)),
                pl.BlockSpec((1, E), lambda i, k: (0, 0)),
                pl.BlockSpec((tm, E), lambda i, k: (i, 0)),
                pl.BlockSpec((1, E), lambda i, k: (0, 0)),
                pl.BlockSpec((1, E), lambda i, k: (0, 0)),
            ],
            out_specs=pl.BlockSpec((tm, E), lambda i, k: (i, 0)),
            scratch_shapes=scratch,
        ),
        compiler_params=_mosaic_params(("parallel", "arbitrary")),
    )(x, w, b.reshape(1, E), res, gamma.reshape(1, E), beta.reshape(1, E))


def ffn_add_ln_pallas(x, w1, b1, w2, b2, gamma, beta):
    """LayerNorm(x + relu(x @ w1 + b1) @ w2 + b2), F-tiled, fused LN epilogue.

    The hidden activation only ever exists as a [tm, tf] value (tf <= 512);
    the output accumulates over F blocks in a f32 VMEM scratch.
    """
    M, E = x.shape
    F = w1.shape[1]
    tm = _pick_tile(M, (256, 128, 64, 32, 16))
    tf = _pick_tile(F, (512, 256, 128))
    gm, gf = M // tm, F // tf

    if gf == 1:
        def kernel(x_ref, w1_ref, b1_ref, w2_ref, b2_ref, g_ref, bt_ref, o_ref):
            h = jnp.dot(x_ref[...], w1_ref[...],
                        preferred_element_type=jnp.float32) + b1_ref[...]
            h = jnp.maximum(h, 0.0)
            y = jnp.dot(h.astype(jnp.bfloat16), w2_ref[...],
                        preferred_element_type=jnp.float32) + b2_ref[...]
            v = y + x_ref[...].astype(jnp.float32)
            o_ref[...] = _layernorm_rows(v, g_ref[...], bt_ref[...]).astype(o_ref.dtype)
        scratch = []
    else:
        def kernel(x_ref, w1_ref, b1_ref, w2_ref, b2_ref, g_ref, bt_ref, o_ref,
                   acc_ref):
            f = pl.program_id(1)

            @pl.when(f == 0)
            def _init():
                acc_ref[...] = jnp.zeros_like(acc_ref)

            h = jnp.dot(x_ref[...], w1_ref[...],
                        preferred_element_type=jnp.float32) + b1_ref[...]
            h = jnp.maximum(h, 0.0)
            acc_ref[...] += jnp.dot(h.astype(jnp.bfloat16), w2_ref[...],
                                    preferred_element_type=jnp.float32)

            @pl.when(f == gf - 1)
            def _fin():
                v = acc_ref[...] + b2_ref[...] + x_ref[...].astype(jnp.float32)
                o_ref[...] = _layernorm_rows(v, g_ref[...], bt_ref[...]).astype(o_ref.dtype)
        scratch = [pltpu.VMEM((tm, E), jnp.float32)]

    return pl.pallas_call(
        kernel,
        out_shape=jax.ShapeDtypeStruct((M, E), ADTYPE),
        grid_spec=pltpu.PrefetchScalarGridSpec(
            num_scalar_prefetch=0,
            grid=(gm, gf),
            in_specs=[
                pl.BlockSpec((tm, E), lambda i, f: (i, 0)),
                pl.BlockSpec((E, tf), lambda i, f: (0, f)),
                pl.BlockSpec((1, tf), lambda i, f: (0, f)),
                pl.BlockSpec((tf, E), lambda i, f: (f, 0)),
                pl.BlockSpec((1, E), lambda i, f: (0, 0)),
                pl.BlockSpec((1, E), lambda i, f: (0, 0)),
                pl.BlockSpec((1, E), lambda i, f: (0, 0)),
            ],
            out_specs=pl.BlockSpec((tm, E), lambda i, f: (i, 0)),
            scratch_shapes=scratch,
        ),
        compiler_params=_mosaic_params(("parallel", "arbitrary")),
    )(x, w1, b1.reshape(1, F), w2, b2.reshape(1, E),
      gamma.reshape(1, E), beta.reshape(1, E))


def layernorm_pallas(x, gamma, beta):
    """Standalone LayerNorm over last dim (encoder/decoder final norms)."""
    M, E = x.shape
    tm = _pick_tile(M, (512, 256, 128, 64, 32, 16))

    def kernel(x_ref, g_ref, b_ref, o_ref):
        v = x_ref[...].astype(jnp.float32)
        o_ref[...] = _layernorm_rows(v, g_ref[...], b_ref[...]).astype(o_ref.dtype)

    return pl.pallas_call(
        kernel,
        out_shape=jax.ShapeDtypeStruct((M, E), ADTYPE),
        grid_spec=pltpu.PrefetchScalarGridSpec(
            num_scalar_prefetch=0,
            grid=(M // tm,),
            in_specs=[
                pl.BlockSpec((tm, E), lambda i: (i, 0)),
                pl.BlockSpec((1, E), lambda i: (0, 0)),
                pl.BlockSpec((1, E), lambda i: (0, 0)),
            ],
            out_specs=pl.BlockSpec((tm, E), lambda i: (i, 0)),
        ),
        compiler_params=_mosaic_params(("parallel",)),
    )(x, gamma.reshape(1, E), beta.reshape(1, E))


def attention_pallas(q, k, v, attn_mask, pad_mask, scale):
    """Flash-style attention; all heads of one batch element per grid step.

    q: [N, H, Sq, D] bf16, k/v: [N, H, Sk, D] bf16.
    attn_mask: [Sq, Sk] additive f32 (causal / src mask), shared over batch & heads.
    pad_mask:  [N, 1, Sk] additive f32 key-padding mask, shared over heads.
    Online softmax streams Sk blocks (m/l/acc scratch); the full [Sq, Sk]
    score tile is never materialized.  Output: [N, H, Sq, D] bf16.
    """
    N, H, Sq, D = q.shape
    Sk = k.shape[2]
    tq = _pick_tile(Sq, (256, 128))
    tk = _pick_tile(Sk, (256, 128))
    gq, gk = Sq // tq, Sk // tk

    def kernel(q_ref, k_ref, v_ref, am_ref, pm_ref, o_ref, m_sc, l_sc, acc_sc):
        ki = pl.program_id(2)

        @pl.when(ki == 0)
        def _init():
            m_sc[...] = jnp.full_like(m_sc, -jnp.inf)
            l_sc[...] = jnp.zeros_like(l_sc)
            acc_sc[...] = jnp.zeros_like(acc_sc)

        s = jnp.einsum('hqd,hkd->hqk', q_ref[0], k_ref[0],
                       preferred_element_type=jnp.float32)       # [H, tq, tk]
        s = s * scale + am_ref[...] + pm_ref[0]                  # masks stay f32

        m_prev = m_sc[...]
        m_new = jnp.maximum(m_prev, jnp.max(s, axis=-1, keepdims=True))
        alpha = jnp.exp(m_prev - m_new)
        p = jnp.exp(s - m_new)
        l_sc[...] = alpha * l_sc[...] + jnp.sum(p, axis=-1, keepdims=True)
        acc_sc[...] = alpha * acc_sc[...] + jnp.einsum(
            'hqk,hkd->hqd', p.astype(jnp.bfloat16), v_ref[0],
            preferred_element_type=jnp.float32)
        m_sc[...] = m_new

        @pl.when(ki == gk - 1)
        def _fin():
            # NOTE: fully masked rows produce a uniform distribution (not NaN).
            inv = pl.reciprocal(l_sc[...], approx=True)          # EUP slot
            o_ref[...] = (acc_sc[...] * inv).astype(o_ref.dtype)[None]

    return pl.pallas_call(
        kernel,
        out_shape=jax.ShapeDtypeStruct((N, H, Sq, D), ADTYPE),
        grid_spec=pltpu.PrefetchScalarGridSpec(
            num_scalar_prefetch=0,
            grid=(N, gq, gk),
            in_specs=[
                pl.BlockSpec((1, H, tq, D), lambda n, qi, ki: (n, 0, qi, 0)),
                pl.BlockSpec((1, H, tk, D), lambda n, qi, ki: (n, 0, ki, 0)),
                pl.BlockSpec((1, H, tk, D), lambda n, qi, ki: (n, 0, ki, 0)),
                pl.BlockSpec((tq, tk), lambda n, qi, ki: (qi, ki)),
                pl.BlockSpec((1, 1, tk), lambda n, qi, ki: (n, 0, ki)),
            ],
            out_specs=pl.BlockSpec((1, H, tq, D), lambda n, qi, ki: (n, 0, qi, 0)),
            scratch_shapes=[pltpu.VMEM((H, tq, 1), jnp.float32),
                            pltpu.VMEM((H, tq, 1), jnp.float32),
                            pltpu.VMEM((H, tq, D), jnp.float32)],
        ),
        compiler_params=_mosaic_params(("parallel", "parallel", "arbitrary")),
    )(q, k, v, attn_mask, pad_mask)


# ----------------------------------------------------------------------------
# Transformer built on the kernels
# ----------------------------------------------------------------------------

def _padding_to_additive(key_padding_mask, N, Sk):
    if key_padding_mask is None:
        return jnp.zeros((N, 1, Sk), jnp.float32)
    return jnp.where(key_padding_mask, NEG, 0.0).astype(jnp.float32).reshape(N, 1, Sk)


def self_attention_block(x, p, nhead, attn_mask, key_padding_mask, ln_g, ln_b):
    """Returns LayerNorm(x + SelfAttention(x)); x: [S, N, E] bf16."""
    S, N, E = x.shape
    hd = E // nhead
    x2d = x.reshape(S * N, E)
    qkv = linear_pallas(x2d, p["w_qkv"], p["b_qkv"])                   # [S*N, 3E]
    # TODO(synk): head split/merge transposes are XLA glue; could be folded
    # into the QKV out_spec / attention index_maps for a head-major layout.
    qkv = qkv.reshape(S, N, 3, nhead, hd).transpose(2, 1, 3, 0, 4)     # [3,N,H,S,D]

    am = (jnp.zeros((S, S), jnp.float32) if attn_mask is None
          else attn_mask.astype(jnp.float32))
    pm = _padding_to_additive(key_padding_mask, N, S)

    oh = attention_pallas(qkv[0], qkv[1], qkv[2], am, pm, 1.0 / math.sqrt(hd))
    o = oh.transpose(2, 0, 1, 3).reshape(S * N, E)                     # [S*N, E]
    # fused output projection + residual + LayerNorm
    out = linear_add_ln_pallas(o, p["wo"], p["bo"], x2d, ln_g, ln_b)
    return out.reshape(S, N, E)


def cross_attention_block(x_q, memory, p, nhead, key_padding_mask, ln_g, ln_b):
    """Returns LayerNorm(x_q + CrossAttention(x_q, memory))."""
    Sq, N, E = x_q.shape
    Sk = memory.shape[0]
    hd = E // nhead
    xq2d = x_q.reshape(Sq * N, E)
    q = linear_pallas(xq2d, p["wq"], p["bq"])                          # [Sq*N, E]
    kv = linear_pallas(memory.reshape(Sk * N, E), p["w_kv"], p["b_kv"])  # [Sk*N, 2E]
    qh = q.reshape(Sq, N, nhead, hd).transpose(1, 2, 0, 3)             # [N,H,Sq,D]
    kv = kv.reshape(Sk, N, 2, nhead, hd).transpose(2, 1, 3, 0, 4)      # [2,N,H,Sk,D]

    am = jnp.zeros((Sq, Sk), jnp.float32)
    pm = _padding_to_additive(key_padding_mask, N, Sk)

    oh = attention_pallas(qh, kv[0], kv[1], am, pm, 1.0 / math.sqrt(hd))
    o = oh.transpose(2, 0, 1, 3).reshape(Sq * N, E)
    out = linear_add_ln_pallas(o, p["wo"], p["bo"], xq2d, ln_g, ln_b)
    return out.reshape(Sq, N, E)


def encoder_layer(x, p, nhead, src_mask, src_padding_mask):
    S, N, E = x.shape
    x = self_attention_block(x, p["sa"], nhead, src_mask, src_padding_mask,
                             p["ln1_g"], p["ln1_b"])
    y = ffn_add_ln_pallas(x.reshape(S * N, E), p["ff"]["w1"], p["ff"]["b1"],
                          p["ff"]["w2"], p["ff"]["b2"], p["ln2_g"], p["ln2_b"])
    return y.reshape(S, N, E)


def decoder_layer(x, memory, p, nhead, tgt_mask, tgt_padding_mask,
                  memory_key_padding_mask):
    T, N, E = x.shape
    x = self_attention_block(x, p["sa"], nhead, tgt_mask, tgt_padding_mask,
                             p["ln1_g"], p["ln1_b"])
    x = cross_attention_block(x, memory, p["ca"], nhead, memory_key_padding_mask,
                              p["ln2_g"], p["ln2_b"])
    y = ffn_add_ln_pallas(x.reshape(T * N, E), p["ff"]["w1"], p["ff"]["b1"],
                          p["ff"]["w2"], p["ff"]["b2"], p["ln3_g"], p["ln3_b"])
    return y.reshape(T, N, E)


def token_embed(tokens, emb_table, emb_size):
    # TODO(synk): data-dependent embedding gather left as XLA glue.
    return jnp.take(emb_table, tokens, axis=0) * math.sqrt(emb_size)


def positional_encoding_table(emb_size, maxlen=128):
    den = jnp.exp(-jnp.arange(0, emb_size, 2, dtype=jnp.float32)
                  * math.log(10000.0) / emb_size)
    pos = jnp.arange(maxlen, dtype=jnp.float32)[:, None]
    pe = jnp.zeros((maxlen, emb_size), jnp.float32)
    pe = pe.at[:, 0::2].set(jnp.sin(pos * den))
    pe = pe.at[:, 1::2].set(jnp.cos(pos * den))
    return pe[:, None, :]  # [maxlen, 1, E]


def seq2seq_transformer_forward(params, src, trg, src_mask, tgt_mask,
                                src_padding_mask, tgt_padding_mask,
                                memory_key_padding_mask, nhead):
    E = params["src_emb"].shape[1]
    pe = params["pos_embedding"]

    src_emb = (token_embed(src, params["src_emb"], E) + pe[: src.shape[0]]).astype(ADTYPE)
    tgt_emb = (token_embed(trg, params["tgt_emb"], E) + pe[: trg.shape[0]]).astype(ADTYPE)
    # dropout: eval mode -> identity

    # Encoder
    mem = src_emb
    for lp in params["enc_layers"]:
        mem = encoder_layer(mem, lp, nhead, src_mask, src_padding_mask)
    S, N, _ = mem.shape
    mem = layernorm_pallas(mem.reshape(S * N, E),
                           params["enc_norm_g"], params["enc_norm_b"]).reshape(S, N, E)

    # Decoder
    out = tgt_emb
    for lp in params["dec_layers"]:
        out = decoder_layer(out, mem, lp, nhead, tgt_mask, tgt_padding_mask,
                            memory_key_padding_mask)
    T = out.shape[0]
    out = layernorm_pallas(out.reshape(T * N, E),
                           params["dec_norm_g"], params["dec_norm_b"]).reshape(T, N, E)

    # Generator: logits stay f32 (final output)
    V = params["gen_w"].shape[1]
    logits = linear_pallas(out.reshape(T * N, E), params["gen_w"], params["gen_b"],
                           out_dtype=jnp.float32).reshape(T, N, V)
    return logits


# ----------------------------------------------------------------------------
# Deterministic parameter init
# ----------------------------------------------------------------------------

def _init_self_attn(key, E):
    k1, k2 = jax.random.split(key)
    s = 0.02
    return {
        "w_qkv": (jax.random.normal(k1, (E, 3 * E), jnp.float32) * s).astype(WDTYPE),
        "b_qkv": jnp.zeros((3 * E,), jnp.float32),
        "wo": (jax.random.normal(k2, (E, E), jnp.float32) * s).astype(WDTYPE),
        "bo": jnp.zeros((E,), jnp.float32),
    }


def _init_cross_attn(key, E):
    k1, k2, k3 = jax.random.split(key, 3)
    s = 0.02
    return {
        "wq": (jax.random.normal(k1, (E, E), jnp.float32) * s).astype(WDTYPE),
        "bq": jnp.zeros((E,), jnp.float32),
        "w_kv": (jax.random.normal(k2, (E, 2 * E), jnp.float32) * s).astype(WDTYPE),
        "b_kv": jnp.zeros((2 * E,), jnp.float32),
        "wo": (jax.random.normal(k3, (E, E), jnp.float32) * s).astype(WDTYPE),
        "bo": jnp.zeros((E,), jnp.float32),
    }


def _init_ffn(key, E, F):
    k1, k2 = jax.random.split(key)
    s = 0.02
    return {
        "w1": (jax.random.normal(k1, (E, F), jnp.float32) * s).astype(WDTYPE),
        "b1": jnp.zeros((F,), jnp.float32),
        "w2": (jax.random.normal(k2, (F, E), jnp.float32) * s).astype(WDTYPE),
        "b2": jnp.zeros((E,), jnp.float32),
    }


def _init_enc_layer(key, E, F):
    k1, k2 = jax.random.split(key)
    return {
        "sa": _init_self_attn(k1, E),
        "ff": _init_ffn(k2, E, F),
        "ln1_g": jnp.ones((E,), jnp.float32), "ln1_b": jnp.zeros((E,), jnp.float32),
        "ln2_g": jnp.ones((E,), jnp.float32), "ln2_b": jnp.zeros((E,), jnp.float32),
    }


def _init_dec_layer(key, E, F):
    k1, k2, k3 = jax.random.split(key, 3)
    return {
        "sa": _init_self_attn(k1, E),
        "ca": _init_cross_attn(k2, E),
        "ff": _init_ffn(k3, E, F),
        "ln1_g": jnp.ones((E,), jnp.float32), "ln1_b": jnp.zeros((E,), jnp.float32),
        "ln2_g": jnp.ones((E,), jnp.float32), "ln2_b": jnp.zeros((E,), jnp.float32),
        "ln3_g": jnp.ones((E,), jnp.float32), "ln3_b": jnp.zeros((E,), jnp.float32),
    }


def init_params(key, num_enc, num_dec, E, F, V, maxlen=128):
    keys = jax.random.split(key, 3 + num_enc + num_dec)
    s = 0.02
    return {
        "src_emb": jax.random.normal(keys[0], (V, E), jnp.float32) * s,
        "tgt_emb": jax.random.normal(keys[1], (V, E), jnp.float32) * s,
        "gen_w": (jax.random.normal(keys[2], (E, V), jnp.float32) * s).astype(WDTYPE),
        "gen_b": jnp.zeros((V,), jnp.float32),
        "pos_embedding": positional_encoding_table(E, maxlen),
        "enc_norm_g": jnp.ones((E,), jnp.float32),
        "enc_norm_b": jnp.zeros((E,), jnp.float32),
        "dec_norm_g": jnp.ones((E,), jnp.float32),
        "dec_norm_b": jnp.zeros((E,), jnp.float32),
        "enc_layers": [_init_enc_layer(keys[3 + i], E, F) for i in range(num_enc)],
        "dec_layers": [_init_dec_layer(keys[3 + num_enc + i], E, F)
                       for i in range(num_dec)],
    }


# ----------------------------------------------------------------------------
# Main
# ----------------------------------------------------------------------------

if __name__ == "__main__":
    # small config
    NUM_ENC, NUM_DEC = 2, 2
    EMB, NHEAD, FFN_DIM, VOCAB = 32, 4, 64, 64
    S, T, N = 8, 8, 2  # src len, tgt len, batch

    key = jax.random.PRNGKey(0)
    kp, ks, kt = jax.random.split(key, 3)

    params = init_params(kp, NUM_ENC, NUM_DEC, EMB, FFN_DIM, VOCAB)

    src = jax.random.randint(ks, (S, N), 0, VOCAB, dtype=jnp.int32)
    trg = jax.random.randint(kt, (T, N), 0, VOCAB, dtype=jnp.int32)

    # masks (same conventions as PyTorch nn.Transformer usage)
    src_mask = jnp.zeros((S, S), jnp.float32)
    tgt_mask = jnp.where(
        jnp.triu(jnp.ones((T, T), jnp.bool_), k=1), NEG, 0.0).astype(jnp.float32)
    src_padding_mask = jnp.zeros((N, S), jnp.bool_).at[1, -1].set(True)
    tgt_padding_mask = jnp.zeros((N, T), jnp.bool_).at[1, -1].set(True)
    memory_key_padding_mask = src_padding_mask

    fwd = jax.jit(functools.partial(seq2seq_transformer_forward, nhead=NHEAD))
    logits = fwd(params, src, trg, src_mask, tgt_mask,
                 src_padding_mask, tgt_padding_mask, memory_key_padding_mask)
    jax.block_until_ready(logits)

    assert logits.shape == (T, N, VOCAB)
    assert bool(jnp.all(jnp.isfinite(logits)))
    print("KERNEL_OK")
</pallas_src>

<mosaic_0001>
module attributes {stable_mosaic.version = 11 : i64} {
  func.func @kernel(%arg0: i32, %arg1: i32, %arg2: i32, %arg3: memref<16x32xbf16, #tpu.memory_space<vmem>>, %arg4: memref<32x96xbf16, #tpu.memory_space<vmem>>, %arg5: memref<1x96xf32, #tpu.memory_space<vmem>>, %arg6: memref<16x96xbf16, #tpu.memory_space<vmem>>) attributes {dimension_semantics = [#tpu.dimension_semantics<parallel>, #tpu.dimension_semantics<parallel>, #tpu.dimension_semantics<arbitrary>], iteration_bounds = array<i64: 1, 1, 1>, scalar_prefetch = 0 : i64, scratch_operands = 0 : i64, tpu.core_type = #tpu.core_type<tc>, window_params = [{transform_indices = @transform_0, window_bounds = array<i64: 16, 32>}, {transform_indices = @transform_1, window_bounds = array<i64: 32, 96>}, {transform_indices = @transform_2, window_bounds = array<i64: 1, 96>}, {transform_indices = @transform_3, window_bounds = array<i64: 16, 96>}]} {
    %c0 = arith.constant 0 : index
    %c0_0 = arith.constant 0 : index
    %0 = vector.load %arg3[%c0, %c0_0] : memref<16x32xbf16, #tpu.memory_space<vmem>>, vector<16x32xbf16>
    %c0_1 = arith.constant 0 : index
    %c0_2 = arith.constant 0 : index
    %1 = vector.load %arg4[%c0_1, %c0_2] : memref<32x96xbf16, #tpu.memory_space<vmem>>, vector<32x96xbf16>
    %cst = arith.constant dense<0.000000e+00> : vector<16x96xf32>
    %2 = tpu.matmul %0, %1, %cst {dimension_numbers = #tpu.dot_dimension_numbers<[1], [0], [0], [1], [0, 0, 1, 1], [], []>} : vector<16x32xbf16>, vector<32x96xbf16>, vector<16x96xf32> -> vector<16x96xf32>
    %c0_3 = arith.constant 0 : index
    %c0_4 = arith.constant 0 : index
    %3 = vector.load %arg5[%c0_3, %c0_4] : memref<1x96xf32, #tpu.memory_space<vmem>>, vector<1x96xf32>
    %4 = vector.broadcast %3 : vector<1x96xf32> to vector<16x96xf32>
    %5 = arith.addf %2, %4 : vector<16x96xf32>
    %6 = arith.truncf %5 : vector<16x96xf32> to vector<16x96xbf16>
    %c0_5 = arith.constant 0 : index
    %c0_6 = arith.constant 0 : index
    %7 = vector.load %arg6[%c0_5, %c0_6] : memref<16x96xbf16, #tpu.memory_space<vmem>>, vector<16x96xbf16>
    tpu.vector_store %arg6[%c0_5, %c0_6], %6 {strides = array<i32>} : memref<16x96xbf16, #tpu.memory_space<vmem>>, vector<16x96xbf16>,
    return
  }
  func.func @transform_0(%arg0: i32, %arg1: i32, %arg2: i32) -> (i32, i32) {
    %c0_i32 = arith.constant 0 : i32
    return %arg0, %arg2 : i32, i32
  }
  func.func @transform_1(%arg0: i32, %arg1: i32, %arg2: i32) -> (i32, i32) {
    %c0_i32 = arith.constant 0 : i32
    return %arg2, %arg1 : i32, i32
  }
  func.func @transform_2(%arg0: i32, %arg1: i32, %arg2: i32) -> (i32, i32) {
    %c0_i32 = arith.constant 0 : i32
    %c0_i32_0 = arith.constant 0 : i32
    return %c0_i32, %arg1 : i32, i32
  }
  func.func @transform_3(%arg0: i32, %arg1: i32, %arg2: i32) -> (i32, i32) {
    %c0_i32 = arith.constant 0 : i32
    return %arg0, %arg1 : i32, i32
  }
}

module attributes {stable_mosaic.version = 11 : i64} {
  func.func @kernel(%arg0: i32, %arg1: i32, %arg2: i32, %arg3: memref<1x4x8x8xbf16, #tpu.memory_space<vmem>>, %arg4: memref<1x4x8x8xbf16, #tpu.memory_space<vmem>>, %arg5: memref<1x4x8x8xbf16, #tpu.memory_space<vmem>>, %arg6: memref<8x8xf32, #tpu.memory_space<vmem>>, %arg7: memref<1x1x8xf32, #tpu.memory_space<vmem>>, %arg8: memref<1x4x8x8xbf16, #tpu.memory_space<vmem>>, %arg9: memref<4x8x1xf32, #tpu.memory_space<vmem>>, %arg10: memref<4x8x1xf32, #tpu.memory_space<vmem>>, %arg11: memref<4x8x8xf32, #tpu.memory_space<vmem>>) attributes {dimension_semantics = [#tpu.dimension_semantics<parallel>, #tpu.dimension_semantics<parallel>, #tpu.dimension_semantics<arbitrary>], iteration_bounds = array<i64: 2, 1, 1>, scalar_prefetch = 0 : i64, scratch_operands = 3 : i64, tpu.core_type = #tpu.core_type<tc>, window_params = [{transform_indices = @transform_0, window_bounds = array<i64: 1, 4, 8, 8>}, {transform_indices = @transform_1, window_bounds = array<i64: 1, 4, 8, 8>}, {transform_indices = @transform_2, window_bounds = array<i64: 1, 4, 8, 8>}, {transform_indices = @transform_3, window_bounds = array<i64: 8, 8>}, {transform_indices = @transform_4, window_bounds = array<i64: 1, 1, 8>}, {transform_indices = @transform_5, window_bounds = array<i64: 1, 4, 8, 8>}]} {
    %c0_i32 = arith.constant 0 : i32
    %0 = arith.cmpi eq, %arg2, %c0_i32 : i32
    %1 = arith.extui %0 : i1 to i32
    %c0_i32_0 = arith.constant 0 : i32
    %2 = arith.cmpi ne, %1, %c0_i32_0 : i32
    scf.if %2 {
      %cst_41 = arith.constant 0xFF800000 : f32
      %47 = vector.broadcast %cst_41 : f32 to vector<4x8x1xf32>
      %c0_42 = arith.constant 0 : index
      %c0_43 = arith.constant 0 : index
      %c0_44 = arith.constant 0 : index
      %48 = vector.load %arg9[%c0_42, %c0_43, %c0_44] : memref<4x8x1xf32, #tpu.memory_space<vmem>>, vector<4x8x1xf32>
      tpu.vector_store %arg9[%c0_42, %c0_43, %c0_44], %47 {strides = array<i32>} : memref<4x8x1xf32, #tpu.memory_space<vmem>>, vector<4x8x1xf32>,
      %cst_45 = arith.constant 0.000000e+00 : f32
      %49 = vector.broadcast %cst_45 : f32 to vector<4x8x1xf32>
      %c0_46 = arith.constant 0 : index
      %c0_47 = arith.constant 0 : index
      %c0_48 = arith.constant 0 : index
      %50 = vector.load %arg10[%c0_46, %c0_47, %c0_48] : memref<4x8x1xf32, #tpu.memory_space<vmem>>, vector<4x8x1xf32>
      tpu.vector_store %arg10[%c0_46, %c0_47, %c0_48], %49 {strides = array<i32>} : memref<4x8x1xf32, #tpu.memory_space<vmem>>, vector<4x8x1xf32>,
      %cst_49 = arith.constant 0.000000e+00 : f32
      %51 = vector.broadcast %cst_49 : f32 to vector<4x8x8xf32>
      %c0_50 = arith.constant 0 : index
      %c0_51 = arith.constant 0 : index
      %c0_52 = arith.constant 0 : index
      %52 = vector.load %arg11[%c0_50, %c0_51, %c0_52] : memref<4x8x8xf32, #tpu.memory_space<vmem>>, vector<4x8x8xf32>
      tpu.vector_store %arg11[%c0_50, %c0_51, %c0_52], %51 {strides = array<i32>} : memref<4x8x8xf32, #tpu.memory_space<vmem>>, vector<4x8x8xf32>,
    } else {
    }
    %c0 = arith.constant 0 : index
    %c0_1 = arith.constant 0 : index
    %c0_2 = arith.constant 0 : index
    %c0_3 = arith.constant 0 : index
    %3 = vector.load %arg3[%c0, %c0_1, %c0_2, %c0_3] : memref<1x4x8x8xbf16, #tpu.memory_space<vmem>>, vector<1x4x8x8xbf16>
    %4 = vector.shape_cast %3 : vector<1x4x8x8xbf16> to vector<4x8x8xbf16>
    %c0_4 = arith.constant 0 : index
    %c0_5 = arith.constant 0 : index
    %c0_6 = arith.constant 0 : index
    %c0_7 = arith.constant 0 : index
    %5 = vector.load %arg4[%c0_4, %c0_5, %c0_6, %c0_7] : memref<1x4x8x8xbf16, #tpu.memory_space<vmem>>, vector<1x4x8x8xbf16>
    %6 = vector.shape_cast %5 : vector<1x4x8x8xbf16> to vector<4x8x8xbf16>
    "tpu.trace_start"() <{level = 10 : i32, message = "hqd,hkd->hqk"}> : () -> ()
    %cst = arith.constant dense<0.000000e+00> : vector<4x8x8xf32>
    %7 = tpu.matmul %4, %6, %cst {dimension_numbers = #tpu.dot_dimension_numbers<[2], [2], [1], [1], [0, 0, 0, 1, 1, 1], [0], [0]>} : vector<4x8x8xbf16>, vector<4x8x8xbf16>, vector<4x8x8xf32> -> vector<4x8x8xf32>
    "tpu.trace_stop"() : () -> ()
    %cst_8 = arith.constant 0.353553385 : f32
    %8 = vector.broadcast %cst_8 : f32 to vector<4x8x8xf32>
    %9 = arith.mulf %7, %8 : vector<4x8x8xf32>
    %c0_9 = arith.constant 0 : index
    %c0_10 = arith.constant 0 : index
    %10 = vector.load %arg6[%c0_9, %c0_10] : memref<8x8xf32, #tpu.memory_space<vmem>>, vector<8x8xf32>
    %11 = vector.shape_cast %10 : vector<8x8xf32> to vector<1x8x8xf32>
    %12 = vector.broadcast %11 : vector<1x8x8xf32> to vector<4x8x8xf32>
    %13 = arith.addf %9, %12 : vector<4x8x8xf32>
    %c0_11 = arith.constant 0 : index
    %c0_12 = arith.constant 0 : index
    %c0_13 = arith.constant 0 : index
    %14 = vector.load %arg7[%c0_11, %c0_12, %c0_13] : memref<1x1x8xf32, #tpu.memory_space<vmem>>, vector<1x1x8xf32>
    %15 = vector.shape_cast %14 : vector<1x1x8xf32> to vector<1x8xf32>
    %16 = vector.shape_cast %15 : vector<1x8xf32> to vector<1x1x8xf32>
    %17 = vector.broadcast %16 : vector<1x1x8xf32> to vector<4x8x8xf32>
    %18 = arith.addf %13, %17 : vector<4x8x8xf32>
    %c0_14 = arith.constant 0 : index
    %c0_15 = arith.constant 0 : index
    %c0_16 = arith.constant 0 : index
    %19 = vector.load %arg9[%c0_14, %c0_15, %c0_16] : memref<4x8x1xf32, #tpu.memory_space<vmem>>, vector<4x8x1xf32>
    %cst_17 = arith.constant dense<0xFF800000> : vector<4x8xf32>
    %20 = vector.multi_reduction <maximumf>, %18, %cst_17 [2] : vector<4x8x8xf32> to vector<4x8xf32>
    %21 = vector.shape_cast %20 : vector<4x8xf32> to vector<4x8x1xf32>
    %22 = arith.maximumf %19, %21 : vector<4x8x1xf32>
    %23 = arith.subf %19, %22 : vector<4x8x1xf32>
    %24 = math.exp %23 : vector<4x8x1xf32>
    %25 = vector.broadcast %22 : vector<4x8x1xf32> to vector<4x8x8xf32>
    %26 = arith.subf %18, %25 : vector<4x8x8xf32>
    %27 = math.exp %26 : vector<4x8x8xf32>
    %c0_18 = arith.constant 0 : index
    %c0_19 = arith.constant 0 : index
    %c0_20 = arith.constant 0 : index
    %28 = vector.load %arg10[%c0_18, %c0_19, %c0_20] : memref<4x8x1xf32, #tpu.memory_space<vmem>>, vector<4x8x1xf32>
    %29 = arith.mulf %24, %28 : vector<4x8x1xf32>
    %cst_21 = arith.constant dense<0.000000e+00> : vector<4x8xf32>
    %30 = vector.multi_reduction <add>, %27, %cst_21 [2] : vector<4x8x8xf32> to vector<4x8xf32>
    %31 = vector.shape_cast %30 : vector<4x8xf32> to vector<4x8x1xf32>
    %32 = arith.addf %29, %31 : vector<4x8x1xf32>
    %c0_22 = arith.constant 0 : index
    %c0_23 = arith.constant 0 : index
    %c0_24 = arith.constant 0 : index
    %33 = vector.load %arg10[%c0_22, %c0_23, %c0_24] : memref<4x8x1xf32, #tpu.memory_space<vmem>>, vector<4x8x1xf32>
    tpu.vector_store %arg10[%c0_22, %c0_23, %c0_24], %32 {strides = array<i32>} : memref<4x8x1xf32, #tpu.memory_space<vmem>>, vector<4x8x1xf32>,
    %c0_25 = arith.constant 0 : index
    %c0_26 = arith.constant 0 : index
    %c0_27 = arith.constant 0 : index
    %34 = vector.load %arg11[%c0_25, %c0_26, %c0_27] : memref<4x8x8xf32, #tpu.memory_space<vmem>>, vector<4x8x8xf32>
    %35 = vector.broadcast %24 : vector<4x8x1xf32> to vector<4x8x8xf32>
    %36 = arith.mulf %35, %34 : vector<4x8x8xf32>
    %37 = arith.truncf %27 : vector<4x8x8xf32> to vector<4x8x8xbf16>
    %c0_28 = arith.constant 0 : index
    %c0_29 = arith.constant 0 : index
    %c0_30 = arith.constant 0 : index
    %c0_31 = arith.constant 0 : index
    %38 = vector.load %arg5[%c0_28, %c0_29, %c0_30, %c0_31] : memref<1x4x8x8xbf16, #tpu.memory_space<vmem>>, vector<1x4x8x8xbf16>
    %39 = vector.shape_cast %38 : vector<1x4x8x8xbf16> to vector<4x8x8xbf16>
    "tpu.trace_start"() <{level = 10 : i32, message = "hqk,hkd->hqd"}> : () -> ()
    %cst_32 = arith.constant dense<0.000000e+00> : vector<4x8x8xf32>
    %40 = tpu.matmul %37, %39, %cst_32 {dimension_numbers = #tpu.dot_dimension_numbers<[2], [1], [1], [2], [0, 0, 0, 1, 1, 2], [0], [0]>} : vector<4x8x8xbf16>, vector<4x8x8xbf16>, vector<4x8x8xf32> -> vector<4x8x8xf32>
    "tpu.trace_stop"() : () -> ()
    %41 = arith.addf %36, %40 : vector<4x8x8xf32>
    %c0_33 = arith.constant 0 : index
    %c0_34 = arith.constant 0 : index
    %c0_35 = arith.constant 0 : index
    %42 = vector.load %arg11[%c0_33, %c0_34, %c0_35] : memref<4x8x8xf32, #tpu.memory_space<vmem>>, vector<4x8x8xf32>
    tpu.vector_store %arg11[%c0_33, %c0_34, %c0_35], %41 {strides = array<i32>} : memref<4x8x8xf32, #tpu.memory_space<vmem>>, vector<4x8x8xf32>,
    %c0_36 = arith.constant 0 : index
    %c0_37 = arith.constant 0 : index
    %c0_38 = arith.constant 0 : index
    %43 = vector.load %arg9[%c0_36, %c0_37, %c0_38] : memref<4x8x1xf32, #tpu.memory_space<vmem>>, vector<4x8x1xf32>
    tpu.vector_store %arg9[%c0_36, %c0_37, %c0_38], %22 {strides = array<i32>} : memref<4x8x1xf32, #tpu.memory_space<vmem>>, vector<4x8x1xf32>,
    %c0_i32_39 = arith.constant 0 : i32
    %44 = arith.cmpi eq, %arg2, %c0_i32_39 : i32
    %45 = arith.extui %44 : i1 to i32
    %c0_i32_40 = arith.constant 0 : i32
    %46 = arith.cmpi ne, %45, %c0_i32_40 : i32
    scf.if %46 {
      %c0_41 = arith.constant 0 : index
      %c0_42 = arith.constant 0 : index
      %c0_43 = arith.constant 0 : index
      %47 = vector.load %arg10[%c0_41, %c0_42, %c0_43] : memref<4x8x1xf32, #tpu.memory_space<vmem>>, vector<4x8x1xf32>
      %48 = tpu.reciprocal %47 {approx = true} : vector<4x8x1xf32> -> vector<4x8x1xf32>
      %c0_44 = arith.constant 0 : index
      %c0_45 = arith.constant 0 : index
      %c0_46 = arith.constant 0 : index
      %49 = vector.load %arg11[%c0_44, %c0_45, %c0_46] : memref<4x8x8xf32, #tpu.memory_space<vmem>>, vector<4x8x8xf32>
      %50 = vector.broadcast %48 : vector<4x8x1xf32> to vector<4x8x8xf32>
      %51 = arith.mulf %49, %50 : vector<4x8x8xf32>
      %52 = arith.truncf %51 : vector<4x8x8xf32> to vector<4x8x8xbf16>
      %53 = vector.shape_cast %52 : vector<4x8x8xbf16> to vector<1x4x8x8xbf16>
      %c0_47 = arith.constant 0 : index
      %c0_48 = arith.constant 0 : index
      %c0_49 = arith.constant 0 : index
      %c0_50 = arith.constant 0 : index
      %54 = vector.load %arg8[%c0_47, %c0_48, %c0_49, %c0_50] : memref<1x4x8x8xbf16, #tpu.memory_space<vmem>>, vector<1x4x8x8xbf16>
      tpu.vector_store %arg8[%c0_47, %c0_48, %c0_49, %c0_50], %53 {strides = array<i32>} : memref<1x4x8x8xbf16, #tpu.memory_space<vmem>>, vector<1x4x8x8xbf16>,
    } else {
    }
    return
  }
  func.func @transform_0(%arg0: i32, %arg1: i32, %arg2: i32) -> (i32, i32, i32, i32) {
    %c0_i32 = arith.constant 0 : i32
    %c0_i32_0 = arith.constant 0 : i32
    %c0_i32_1 = arith.constant 0 : i32
    return %arg0, %c0_i32, %arg1, %c0_i32_0 : i32, i32, i32, i32
  }
  func.func @transform_1(%arg0: i32, %arg1: i32, %arg2: i32) -> (i32, i32, i32, i32) {
    %c0_i32 = arith.constant 0 : i32
    %c0_i32_0 = arith.constant 0 : i32
    %c0_i32_1 = arith.constant 0 : i32
    return %arg0, %c0_i32, %arg2, %c0_i32_0 : i32, i32, i32, i32
  }
  func.func @transform_2(%arg0: i32, %arg1: i32, %arg2: i32) -> (i32, i32, i32, i32) {
    %c0_i32 = arith.constant 0 : i32
    %c0_i32_0 = arith.constant 0 : i32
    %c0_i32_1 = arith.constant 0 : i32
    return %arg0, %c0_i32, %arg2, %c0_i32_0 : i32, i32, i32, i32
  }
  func.func @transform_3(%arg0: i32, %arg1: i32, %arg2: i32) -> (i32, i32) {
    %c0_i32 = arith.constant 0 : i32
    return %arg1, %arg2 : i32, i32
  }
  func.func @transform_4(%arg0: i32, %arg1: i32, %arg2: i32) -> (i32, i32, i32) {
    %c0_i32 = arith.constant 0 : i32
    %c0_i32_0 = arith.constant 0 : i32
    return %arg0, %c0_i32, %arg2 : i32, i32, i32
  }
  func.func @transform_5(%arg0: i32, %arg1: i32, %arg2: i32) -> (i32, i32, i32, i32) {
    %c0_i32 = arith.constant 0 : i32
    %c0_i32_0 = arith.constant 0 : i32
    %c0_i32_1 = arith.constant 0 : i32
    return %arg0, %c0_i32, %arg1, %c0_i32_0 : i32, i32, i32, i32
  }
}

module attributes {stable_mosaic.version = 11 : i64} {
  func.func @kernel(%arg0: i32, %arg1: i32, %arg2: memref<16x32xbf16, #tpu.memory_space<vmem>>, %arg3: memref<32x32xbf16, #tpu.memory_space<vmem>>, %arg4: memref<1x32xf32, #tpu.memory_space<vmem>>, %arg5: memref<16x32xbf16, #tpu.memory_space<vmem>>, %arg6: memref<1x32xf32, #tpu.memory_space<vmem>>, %arg7: memref<1x32xf32, #tpu.memory_space<vmem>>, %arg8: memref<16x32xbf16, #tpu.memory_space<vmem>>) attributes {dimension_semantics = [#tpu.dimension_semantics<parallel>, #tpu.dimension_semantics<arbitrary>], iteration_bounds = array<i64: 1, 1>, scalar_prefetch = 0 : i64, scratch_operands = 0 : i64, tpu.core_type = #tpu.core_type<tc>, window_params = [{transform_indices = @transform_0, window_bounds = array<i64: 16, 32>}, {transform_indices = @transform_1, window_bounds = array<i64: 32, 32>}, {pipeline_mode = #tpu.pipeline_mode<synchronous>, transform_indices = @transform_2, window_bounds = array<i64: 1, 32>}, {transform_indices = @transform_3, window_bounds = array<i64: 16, 32>}, {pipeline_mode = #tpu.pipeline_mode<synchronous>, transform_indices = @transform_4, window_bounds = array<i64: 1, 32>}, {pipeline_mode = #tpu.pipeline_mode<synchronous>, transform_indices = @transform_5, window_bounds = array<i64: 1, 32>}, {transform_indices = @transform_6, window_bounds = array<i64: 16, 32>}]} {
    %c0 = arith.constant 0 : index
    %c0_0 = arith.constant 0 : index
    %0 = vector.load %arg2[%c0, %c0_0] : memref<16x32xbf16, #tpu.memory_space<vmem>>, vector<16x32xbf16>
    %c0_1 = arith.constant 0 : index
    %c0_2 = arith.constant 0 : index
    %1 = vector.load %arg3[%c0_1, %c0_2] : memref<32x32xbf16, #tpu.memory_space<vmem>>, vector<32x32xbf16>
    %cst = arith.constant dense<0.000000e+00> : vector<16x32xf32>
    %2 = tpu.matmul %0, %1, %cst {dimension_numbers = #tpu.dot_dimension_numbers<[1], [0], [0], [1], [0, 0, 1, 1], [], []>} : vector<16x32xbf16>, vector<32x32xbf16>, vector<16x32xf32> -> vector<16x32xf32>
    %c0_3 = arith.constant 0 : index
    %c0_4 = arith.constant 0 : index
    %3 = vector.load %arg4[%c0_3, %c0_4] : memref<1x32xf32, #tpu.memory_space<vmem>>, vector<1x32xf32>
    %4 = vector.broadcast %3 : vector<1x32xf32> to vector<16x32xf32>
    %5 = arith.addf %2, %4 : vector<16x32xf32>
    %c0_5 = arith.constant 0 : index
    %c0_6 = arith.constant 0 : index
    %6 = vector.load %arg5[%c0_5, %c0_6] : memref<16x32xbf16, #tpu.memory_space<vmem>>, vector<16x32xbf16>
    %7 = arith.extf %6 : vector<16x32xbf16> to vector<16x32xf32>
    %8 = arith.addf %5, %7 : vector<16x32xf32>
    %c0_7 = arith.constant 0 : index
    %c0_8 = arith.constant 0 : index
    %9 = vector.load %arg6[%c0_7, %c0_8] : memref<1x32xf32, #tpu.memory_space<vmem>>, vector<1x32xf32>
    %c0_9 = arith.constant 0 : index
    %c0_10 = arith.constant 0 : index
    %10 = vector.load %arg7[%c0_9, %c0_10] : memref<1x32xf32, #tpu.memory_space<vmem>>, vector<1x32xf32>
    %cst_11 = arith.constant dense<0.000000e+00> : vector<16xf32>
    %11 = vector.multi_reduction <add>, %8, %cst_11 [1] : vector<16x32xf32> to vector<16xf32>
    %12 = vector.shape_cast %11 : vector<16xf32> to vector<16x1xf32>
    %cst_12 = arith.constant 3.200000e+01 : f32
    %13 = vector.broadcast %cst_12 : f32 to vector<16x1xf32>
    %14 = arith.divf %12, %13 : vector<16x1xf32>
    %15 = vector.broadcast %14 : vector<16x1xf32> to vector<16x32xf32>
    %16 = arith.subf %8, %15 : vector<16x32xf32>
    %17 = arith.mulf %16, %16 : vector<16x32xf32>
    %cst_13 = arith.constant dense<0.000000e+00> : vector<16xf32>
    %18 = vector.multi_reduction <add>, %17, %cst_13 [1] : vector<16x32xf32> to vector<16xf32>
    %19 = vector.shape_cast %18 : vector<16xf32> to vector<16x1xf32>
    %cst_14 = arith.constant 3.200000e+01 : f32
    %20 = vector.broadcast %cst_14 : f32 to vector<16x1xf32>
    %21 = arith.divf %19, %20 : vector<16x1xf32>
    %22 = vector.broadcast %14 : vector<16x1xf32> to vector<16x32xf32>
    %23 = arith.subf %8, %22 : vector<16x32xf32>
    %cst_15 = arith.constant 9.99999974E-6 : f32
    %24 = vector.broadcast %cst_15 : f32 to vector<16x1xf32>
    %25 = arith.addf %21, %24 : vector<16x1xf32>
    %26 = math.rsqrt %25 : vector<16x1xf32>
    %27 = vector.broadcast %26 : vector<16x1xf32> to vector<16x32xf32>
    %28 = arith.mulf %23, %27 : vector<16x32xf32>
    %29 = vector.broadcast %9 : vector<1x32xf32> to vector<16x32xf32>
    %30 = arith.mulf %28, %29 : vector<16x32xf32>
    %31 = vector.broadcast %10 : vector<1x32xf32> to vector<16x32xf32>
    %32 = arith.addf %30, %31 : vector<16x32xf32>
    %33 = arith.truncf %32 : vector<16x32xf32> to vector<16x32xbf16>
    %c0_16 = arith.constant 0 : index
    %c0_17 = arith.constant 0 : index
    %34 = vector.load %arg8[%c0_16, %c0_17] : memref<16x32xbf16, #tpu.memory_space<vmem>>, vector<16x32xbf16>
    tpu.vector_store %arg8[%c0_16, %c0_17], %33 {strides = array<i32>} : memref<16x32xbf16, #tpu.memory_space<vmem>>, vector<16x32xbf16>,
    return
  }
  func.func @transform_0(%arg0: i32, %arg1: i32) -> (i32, i32) {
    %c0_i32 = arith.constant 0 : i32
    return %arg0, %arg1 : i32, i32
  }
  func.func @transform_1(%arg0: i32, %arg1: i32) -> (i32, i32) {
    %c0_i32 = arith.constant 0 : i32
    %c0_i32_0 = arith.constant 0 : i32
    return %arg1, %c0_i32 : i32, i32
  }
  func.func @transform_2(%arg0: i32, %arg1: i32) -> (i32, i32) {
    %c0_i32 = arith.constant 0 : i32
    %c0_i32_0 = arith.constant 0 : i32
    %c0_i32_1 = arith.constant 0 : i32
    return %c0_i32, %c0_i32_0 : i32, i32
  }
  func.func @transform_3(%arg0: i32, %arg1: i32) -> (i32, i32) {
    %c0_i32 = arith.constant 0 : i32
    %c0_i32_0 = arith.constant 0 : i32
    return %arg0, %c0_i32 : i32, i32
  }
  func.func @transform_4(%arg0: i32, %arg1: i32) -> (i32, i32) {
    %c0_i32 = arith.constant 0 : i32
    %c0_i32_0 = arith.constant 0 : i32
    %c0_i32_1 = arith.constant 0 : i32
    return %c0_i32, %c0_i32_0 : i32, i32
  }
  func.func @transform_5(%arg0: i32, %arg1: i32) -> (i32, i32) {
    %c0_i32 = arith.constant 0 : i32
    %c0_i32_0 = arith.constant 0 : i32
    %c0_i32_1 = arith.constant 0 : i32
    return %c0_i32, %c0_i32_0 : i32, i32
  }
  func.func @transform_6(%arg0: i32, %arg1: i32) -> (i32, i32) {
    %c0_i32 = arith.constant 0 : i32
    %c0_i32_0 = arith.constant 0 : i32
    return %arg0, %c0_i32 : i32, i32
  }
}

module attributes {stable_mosaic.version = 11 : i64} {
  func.func @kernel(%arg0: i32, %arg1: i32, %arg2: i32, %arg3: memref<16x32xbf16, #tpu.memory_space<vmem>>, %arg4: memref<32x32xbf16, #tpu.memory_space<vmem>>, %arg5: memref<1x32xf32, #tpu.memory_space<vmem>>, %arg6: memref<16x32xbf16, #tpu.memory_space<vmem>>) attributes {dimension_semantics = [#tpu.dimension_semantics<parallel>, #tpu.dimension_semantics<parallel>, #tpu.dimension_semantics<arbitrary>], iteration_bounds = array<i64: 1, 1, 1>, scalar_prefetch = 0 : i64, scratch_operands = 0 : i64, tpu.core_type = #tpu.core_type<tc>, window_params = [{transform_indices = @transform_0, window_bounds = array<i64: 16, 32>}, {transform_indices = @transform_1, window_bounds = array<i64: 32, 32>}, {transform_indices = @transform_2, window_bounds = array<i64: 1, 32>}, {transform_indices = @transform_3, window_bounds = array<i64: 16, 32>}]} {
    %c0 = arith.constant 0 : index
    %c0_0 = arith.constant 0 : index
    %0 = vector.load %arg3[%c0, %c0_0] : memref<16x32xbf16, #tpu.memory_space<vmem>>, vector<16x32xbf16>
    %c0_1 = arith.constant 0 : index
    %c0_2 = arith.constant 0 : index
    %1 = vector.load %arg4[%c0_1, %c0_2] : memref<32x32xbf16, #tpu.memory_space<vmem>>, vector<32x32xbf16>
    %cst = arith.constant dense<0.000000e+00> : vector<16x32xf32>
    %2 = tpu.matmul %0, %1, %cst {dimension_numbers = #tpu.dot_dimension_numbers<[1], [0], [0], [1], [0, 0, 1, 1], [], []>} : vector<16x32xbf16>, vector<32x32xbf16>, vector<16x32xf32> -> vector<16x32xf32>
    %c0_3 = arith.constant 0 : index
    %c0_4 = arith.constant 0 : index
    %3 = vector.load %arg5[%c0_3, %c0_4] : memref<1x32xf32, #tpu.memory_space<vmem>>, vector<1x32xf32>
    %4 = vector.broadcast %3 : vector<1x32xf32> to vector<16x32xf32>
    %5 = arith.addf %2, %4 : vector<16x32xf32>
    %6 = arith.truncf %5 : vector<16x32xf32> to vector<16x32xbf16>
    %c0_5 = arith.constant 0 : index
    %c0_6 = arith.constant 0 : index
    %7 = vector.load %arg6[%c0_5, %c0_6] : memref<16x32xbf16, #tpu.memory_space<vmem>>, vector<16x32xbf16>
    tpu.vector_store %arg6[%c0_5, %c0_6], %6 {strides = array<i32>} : memref<16x32xbf16, #tpu.memory_space<vmem>>, vector<16x32xbf16>,
    return
  }
  func.func @transform_0(%arg0: i32, %arg1: i32, %arg2: i32) -> (i32, i32) {
    %c0_i32 = arith.constant 0 : i32
    return %arg0, %arg2 : i32, i32
  }
  func.func @transform_1(%arg0: i32, %arg1: i32, %arg2: i32) -> (i32, i32) {
    %c0_i32 = arith.constant 0 : i32
    return %arg2, %arg1 : i32, i32
  }
  func.func @transform_2(%arg0: i32, %arg1: i32, %arg2: i32) -> (i32, i32) {
    %c0_i32 = arith.constant 0 : i32
    %c0_i32_0 = arith.constant 0 : i32
    return %c0_i32, %arg1 : i32, i32
  }
  func.func @transform_3(%arg0: i32, %arg1: i32, %arg2: i32) -> (i32, i32) {
    %c0_i32 = arith.constant 0 : i32
    return %arg0, %arg1 : i32, i32
  }
}

module attributes {stable_mosaic.version = 11 : i64} {
  func.func @kernel(%arg0: i32, %arg1: i32, %arg2: memref<16x32xbf16, #tpu.memory_space<vmem>>, %arg3: memref<32x64xbf16, #tpu.memory_space<vmem>>, %arg4: memref<1x64xf32, #tpu.memory_space<vmem>>, %arg5: memref<64x32xbf16, #tpu.memory_space<vmem>>, %arg6: memref<1x32xf32, #tpu.memory_space<vmem>>, %arg7: memref<1x32xf32, #tpu.memory_space<vmem>>, %arg8: memref<1x32xf32, #tpu.memory_space<vmem>>, %arg9: memref<16x32xbf16, #tpu.memory_space<vmem>>) attributes {dimension_semantics = [#tpu.dimension_semantics<parallel>, #tpu.dimension_semantics<arbitrary>], iteration_bounds = array<i64: 1, 1>, scalar_prefetch = 0 : i64, scratch_operands = 0 : i64, tpu.core_type = #tpu.core_type<tc>, window_params = [{transform_indices = @transform_0, window_bounds = array<i64: 16, 32>}, {transform_indices = @transform_1, window_bounds = array<i64: 32, 64>}, {transform_indices = @transform_2, window_bounds = array<i64: 1, 64>}, {transform_indices = @transform_3, window_bounds = array<i64: 64, 32>}, {pipeline_mode = #tpu.pipeline_mode<synchronous>, transform_indices = @transform_4, window_bounds = array<i64: 1, 32>}, {pipeline_mode = #tpu.pipeline_mode<synchronous>, transform_indices = @transform_5, window_bounds = array<i64: 1, 32>}, {pipeline_mode = #tpu.pipeline_mode<synchronous>, transform_indices = @transform_6, window_bounds = array<i64: 1, 32>}, {transform_indices = @transform_7, window_bounds = array<i64: 16, 32>}]} {
    %c0 = arith.constant 0 : index
    %c0_0 = arith.constant 0 : index
    %0 = vector.load %arg2[%c0, %c0_0] : memref<16x32xbf16, #tpu.memory_space<vmem>>, vector<16x32xbf16>
    %c0_1 = arith.constant 0 : index
    %c0_2 = arith.constant 0 : index
    %1 = vector.load %arg3[%c0_1, %c0_2] : memref<32x64xbf16, #tpu.memory_space<vmem>>, vector<32x64xbf16>
    %cst = arith.constant dense<0.000000e+00> : vector<16x64xf32>
    %2 = tpu.matmul %0, %1, %cst {dimension_numbers = #tpu.dot_dimension_numbers<[1], [0], [0], [1], [0, 0, 1, 1], [], []>} : vector<16x32xbf16>, vector<32x64xbf16>, vector<16x64xf32> -> vector<16x64xf32>
    %c0_3 = arith.constant 0 : index
    %c0_4 = arith.constant 0 : index
    %3 = vector.load %arg4[%c0_3, %c0_4] : memref<1x64xf32, #tpu.memory_space<vmem>>, vector<1x64xf32>
    %4 = vector.broadcast %3 : vector<1x64xf32> to vector<16x64xf32>
    %5 = arith.addf %2, %4 : vector<16x64xf32>
    %cst_5 = arith.constant 0.000000e+00 : f32
    %6 = vector.broadcast %cst_5 : f32 to vector<16x64xf32>
    %7 = arith.maximumf %5, %6 : vector<16x64xf32>
    %8 = arith.truncf %7 : vector<16x64xf32> to vector<16x64xbf16>
    %c0_6 = arith.constant 0 : index
    %c0_7 = arith.constant 0 : index
    %9 = vector.load %arg5[%c0_6, %c0_7] : memref<64x32xbf16, #tpu.memory_space<vmem>>, vector<64x32xbf16>
    %cst_8 = arith.constant dense<0.000000e+00> : vector<16x32xf32>
    %10 = tpu.matmul %8, %9, %cst_8 {dimension_numbers = #tpu.dot_dimension_numbers<[1], [0], [0], [1], [0, 0, 1, 1], [], []>} : vector<16x64xbf16>, vector<64x32xbf16>, vector<16x32xf32> -> vector<16x32xf32>
    %c0_9 = arith.constant 0 : index
    %c0_10 = arith.constant 0 : index
    %11 = vector.load %arg6[%c0_9, %c0_10] : memref<1x32xf32, #tpu.memory_space<vmem>>, vector<1x32xf32>
    %12 = vector.broadcast %11 : vector<1x32xf32> to vector<16x32xf32>
    %13 = arith.addf %10, %12 : vector<16x32xf32>
    %c0_11 = arith.constant 0 : index
    %c0_12 = arith.constant 0 : index
    %14 = vector.load %arg2[%c0_11, %c0_12] : memref<16x32xbf16, #tpu.memory_space<vmem>>, vector<16x32xbf16>
    %15 = arith.extf %14 : vector<16x32xbf16> to vector<16x32xf32>
    %16 = arith.addf %13, %15 : vector<16x32xf32>
    %c0_13 = arith.constant 0 : index
    %c0_14 = arith.constant 0 : index
    %17 = vector.load %arg7[%c0_13, %c0_14] : memref<1x32xf32, #tpu.memory_space<vmem>>, vector<1x32xf32>
    %c0_15 = arith.constant 0 : index
    %c0_16 = arith.constant 0 : index
    %18 = vector.load %arg8[%c0_15, %c0_16] : memref<1x32xf32, #tpu.memory_space<vmem>>, vector<1x32xf32>
    %cst_17 = arith.constant dense<0.000000e+00> : vector<16xf32>
    %19 = vector.multi_reduction <add>, %16, %cst_17 [1] : vector<16x32xf32> to vector<16xf32>
    %20 = vector.shape_cast %19 : vector<16xf32> to vector<16x1xf32>
    %cst_18 = arith.constant 3.200000e+01 : f32
    %21 = vector.broadcast %cst_18 : f32 to vector<16x1xf32>
    %22 = arith.divf %20, %21 : vector<16x1xf32>
    %23 = vector.broadcast %22 : vector<16x1xf32> to vector<16x32xf32>
    %24 = arith.subf %16, %23 : vector<16x32xf32>
    %25 = arith.mulf %24, %24 : vector<16x32xf32>
    %cst_19 = arith.constant dense<0.000000e+00> : vector<16xf32>
    %26 = vector.multi_reduction <add>, %25, %cst_19 [1] : vector<16x32xf32> to vector<16xf32>
    %27 = vector.shape_cast %26 : vector<16xf32> to vector<16x1xf32>
    %cst_20 = arith.constant 3.200000e+01 : f32
    %28 = vector.broadcast %cst_20 : f32 to vector<16x1xf32>
    %29 = arith.divf %27, %28 : vector<16x1xf32>
    %30 = vector.broadcast %22 : vector<16x1xf32> to vector<16x32xf32>
    %31 = arith.subf %16, %30 : vector<16x32xf32>
    %cst_21 = arith.constant 9.99999974E-6 : f32
    %32 = vector.broadcast %cst_21 : f32 to vector<16x1xf32>
    %33 = arith.addf %29, %32 : vector<16x1xf32>
    %34 = math.rsqrt %33 : vector<16x1xf32>
    %35 = vector.broadcast %34 : vector<16x1xf32> to vector<16x32xf32>
    %36 = arith.mulf %31, %35 : vector<16x32xf32>
    %37 = vector.broadcast %17 : vector<1x32xf32> to vector<16x32xf32>
    %38 = arith.mulf %36, %37 : vector<16x32xf32>
    %39 = vector.broadcast %18 : vector<1x32xf32> to vector<16x32xf32>
    %40 = arith.addf %38, %39 : vector<16x32xf32>
    %41 = arith.truncf %40 : vector<16x32xf32> to vector<16x32xbf16>
    %c0_22 = arith.constant 0 : index
    %c0_23 = arith.constant 0 : index
    %42 = vector.load %arg9[%c0_22, %c0_23] : memref<16x32xbf16, #tpu.memory_space<vmem>>, vector<16x32xbf16>
    tpu.vector_store %arg9[%c0_22, %c0_23], %41 {strides = array<i32>} : memref<16x32xbf16, #tpu.memory_space<vmem>>, vector<16x32xbf16>,
    return
  }
  func.func @transform_0(%arg0: i32, %arg1: i32) -> (i32, i32) {
    %c0_i32 = arith.constant 0 : i32
    %c0_i32_0 = arith.constant 0 : i32
    return %arg0, %c0_i32 : i32, i32
  }
  func.func @transform_1(%arg0: i32, %arg1: i32) -> (i32, i32) {
    %c0_i32 = arith.constant 0 : i32
    %c0_i32_0 = arith.constant 0 : i32
    return %c0_i32, %arg1 : i32, i32
  }
  func.func @transform_2(%arg0: i32, %arg1: i32) -> (i32, i32) {
    %c0_i32 = arith.constant 0 : i32
    %c0_i32_0 = arith.constant 0 : i32
    return %c0_i32, %arg1 : i32, i32
  }
  func.func @transform_3(%arg0: i32, %arg1: i32) -> (i32, i32) {
    %c0_i32 = arith.constant 0 : i32
    %c0_i32_0 = arith.constant 0 : i32
    return %arg1, %c0_i32 : i32, i32
  }
  func.func @transform_4(%arg0: i32, %arg1: i32) -> (i32, i32) {
    %c0_i32 = arith.constant 0 : i32
    %c0_i32_0 = arith.constant 0 : i32
    %c0_i32_1 = arith.constant 0 : i32
    return %c0_i32, %c0_i32_0 : i32, i32
  }
  func.func @transform_5(%arg0: i32, %arg1: i32) -> (i32, i32) {
    %c0_i32 = arith.constant 0 : i32
    %c0_i32_0 = arith.constant 0 : i32
    %c0_i32_1 = arith.constant 0 : i32
    return %c0_i32, %c0_i32_0 : i32, i32
  }
  func.func @transform_6(%arg0: i32, %arg1: i32) -> (i32, i32) {
    %c0_i32 = arith.constant 0 : i32
    %c0_i32_0 = arith.constant 0 : i32
    %c0_i32_1 = arith.constant 0 : i32
    return %c0_i32, %c0_i32_0 : i32, i32
  }
  func.func @transform_7(%arg0: i32, %arg1: i32) -> (i32, i32) {
    %c0_i32 = arith.constant 0 : i32
    %c0_i32_0 = arith.constant 0 : i32
    return %arg0, %c0_i32 : i32, i32
  }
}

module attributes {stable_mosaic.version = 11 : i64} {
  func.func @kernel(%arg0: i32, %arg1: i32, %arg2: i32, %arg3: memref<16x32xbf16, #tpu.memory_space<vmem>>, %arg4: memref<32x64xbf16, #tpu.memory_space<vmem>>, %arg5: memref<1x64xf32, #tpu.memory_space<vmem>>, %arg6: memref<16x64xbf16, #tpu.memory_space<vmem>>) attributes {dimension_semantics = [#tpu.dimension_semantics<parallel>, #tpu.dimension_semantics<parallel>, #tpu.dimension_semantics<arbitrary>], iteration_bounds = array<i64: 1, 1, 1>, scalar_prefetch = 0 : i64, scratch_operands = 0 : i64, tpu.core_type = #tpu.core_type<tc>, window_params = [{transform_indices = @transform_0, window_bounds = array<i64: 16, 32>}, {transform_indices = @transform_1, window_bounds = array<i64: 32, 64>}, {transform_indices = @transform_2, window_bounds = array<i64: 1, 64>}, {transform_indices = @transform_3, window_bounds = array<i64: 16, 64>}]} {
    %c0 = arith.constant 0 : index
    %c0_0 = arith.constant 0 : index
    %0 = vector.load %arg3[%c0, %c0_0] : memref<16x32xbf16, #tpu.memory_space<vmem>>, vector<16x32xbf16>
    %c0_1 = arith.constant 0 : index
    %c0_2 = arith.constant 0 : index
    %1 = vector.load %arg4[%c0_1, %c0_2] : memref<32x64xbf16, #tpu.memory_space<vmem>>, vector<32x64xbf16>
    %cst = arith.constant dense<0.000000e+00> : vector<16x64xf32>
    %2 = tpu.matmul %0, %1, %cst {dimension_numbers = #tpu.dot_dimension_numbers<[1], [0], [0], [1], [0, 0, 1, 1], [], []>} : vector<16x32xbf16>, vector<32x64xbf16>, vector<16x64xf32> -> vector<16x64xf32>
    %c0_3 = arith.constant 0 : index
    %c0_4 = arith.constant 0 : index
    %3 = vector.load %arg5[%c0_3, %c0_4] : memref<1x64xf32, #tpu.memory_space<vmem>>, vector<1x64xf32>
    %4 = vector.broadcast %3 : vector<1x64xf32> to vector<16x64xf32>
    %5 = arith.addf %2, %4 : vector<16x64xf32>
    %6 = arith.truncf %5 : vector<16x64xf32> to vector<16x64xbf16>
    %c0_5 = arith.constant 0 : index
    %c0_6 = arith.constant 0 : index
    %7 = vector.load %arg6[%c0_5, %c0_6] : memref<16x64xbf16, #tpu.memory_space<vmem>>, vector<16x64xbf16>
    tpu.vector_store %arg6[%c0_5, %c0_6], %6 {strides = array<i32>} : memref<16x64xbf16, #tpu.memory_space<vmem>>, vector<16x64xbf16>,
    return
  }
  func.func @transform_0(%arg0: i32, %arg1: i32, %arg2: i32) -> (i32, i32) {
    %c0_i32 = arith.constant 0 : i32
    return %arg0, %arg2 : i32, i32
  }
  func.func @transform_1(%arg0: i32, %arg1: i32, %arg2: i32) -> (i32, i32) {
    %c0_i32 = arith.constant 0 : i32
    return %arg2, %arg1 : i32, i32
  }
  func.func @transform_2(%arg0: i32, %arg1: i32, %arg2: i32) -> (i32, i32) {
    %c0_i32 = arith.constant 0 : i32
    %c0_i32_0 = arith.constant 0 : i32
    return %c0_i32, %arg1 : i32, i32
  }
  func.func @transform_3(%arg0: i32, %arg1: i32, %arg2: i32) -> (i32, i32) {
    %c0_i32 = arith.constant 0 : i32
    return %arg0, %arg1 : i32, i32
  }
}

module attributes {stable_mosaic.version = 11 : i64} {
  func.func @kernel(%arg0: i32, %arg1: memref<16x32xbf16, #tpu.memory_space<vmem>>, %arg2: memref<1x32xf32, #tpu.memory_space<vmem>>, %arg3: memref<1x32xf32, #tpu.memory_space<vmem>>, %arg4: memref<16x32xbf16, #tpu.memory_space<vmem>>) attributes {dimension_semantics = [#tpu.dimension_semantics<parallel>], iteration_bounds = array<i64: 1>, scalar_prefetch = 0 : i64, scratch_operands = 0 : i64, tpu.core_type = #tpu.core_type<tc>, window_params = [{transform_indices = @transform_0, window_bounds = array<i64: 16, 32>}, {pipeline_mode = #tpu.pipeline_mode<synchronous>, transform_indices = @transform_1, window_bounds = array<i64: 1, 32>}, {pipeline_mode = #tpu.pipeline_mode<synchronous>, transform_indices = @transform_2, window_bounds = array<i64: 1, 32>}, {transform_indices = @transform_3, window_bounds = array<i64: 16, 32>}]} {
    %c0 = arith.constant 0 : index
    %c0_0 = arith.constant 0 : index
    %0 = vector.load %arg1[%c0, %c0_0] : memref<16x32xbf16, #tpu.memory_space<vmem>>, vector<16x32xbf16>
    %1 = arith.extf %0 : vector<16x32xbf16> to vector<16x32xf32>
    %c0_1 = arith.constant 0 : index
    %c0_2 = arith.constant 0 : index
    %2 = vector.load %arg2[%c0_1, %c0_2] : memref<1x32xf32, #tpu.memory_space<vmem>>, vector<1x32xf32>
    %c0_3 = arith.constant 0 : index
    %c0_4 = arith.constant 0 : index
    %3 = vector.load %arg3[%c0_3, %c0_4] : memref<1x32xf32, #tpu.memory_space<vmem>>, vector<1x32xf32>
    %cst = arith.constant dense<0.000000e+00> : vector<16xf32>
    %4 = vector.multi_reduction <add>, %1, %cst [1] : vector<16x32xf32> to vector<16xf32>
    %5 = vector.shape_cast %4 : vector<16xf32> to vector<16x1xf32>
    %cst_5 = arith.constant 3.200000e+01 : f32
    %6 = vector.broadcast %cst_5 : f32 to vector<16x1xf32>
    %7 = arith.divf %5, %6 : vector<16x1xf32>
    %8 = vector.broadcast %7 : vector<16x1xf32> to vector<16x32xf32>
    %9 = arith.subf %1, %8 : vector<16x32xf32>
    %10 = arith.mulf %9, %9 : vector<16x32xf32>
    %cst_6 = arith.constant dense<0.000000e+00> : vector<16xf32>
    %11 = vector.multi_reduction <add>, %10, %cst_6 [1] : vector<16x32xf32> to vector<16xf32>
    %12 = vector.shape_cast %11 : vector<16xf32> to vector<16x1xf32>
    %cst_7 = arith.constant 3.200000e+01 : f32
    %13 = vector.broadcast %cst_7 : f32 to vector<16x1xf32>
    %14 = arith.divf %12, %13 : vector<16x1xf32>
    %15 = vector.broadcast %7 : vector<16x1xf32> to vector<16x32xf32>
    %16 = arith.subf %1, %15 : vector<16x32xf32>
    %cst_8 = arith.constant 9.99999974E-6 : f32
    %17 = vector.broadcast %cst_8 : f32 to vector<16x1xf32>
    %18 = arith.addf %14, %17 : vector<16x1xf32>
    %19 = math.rsqrt %18 : vector<16x1xf32>
    %20 = vector.broadcast %19 : vector<16x1xf32> to vector<16x32xf32>
    %21 = arith.mulf %16, %20 : vector<16x32xf32>
    %22 = vector.broadcast %2 : vector<1x32xf32> to vector<16x32xf32>
    %23 = arith.mulf %21, %22 : vector<16x32xf32>
    %24 = vector.broadcast %3 : vector<1x32xf32> to vector<16x32xf32>
    %25 = arith.addf %23, %24 : vector<16x32xf32>
    %26 = arith.truncf %25 : vector<16x32xf32> to vector<16x32xbf16>
    %c0_9 = arith.constant 0 : index
    %c0_10 = arith.constant 0 : index
    %27 = vector.load %arg4[%c0_9, %c0_10] : memref<16x32xbf16, #tpu.memory_space<vmem>>, vector<16x32xbf16>
    tpu.vector_store %arg4[%c0_9, %c0_10], %26 {strides = array<i32>} : memref<16x32xbf16, #tpu.memory_space<vmem>>, vector<16x32xbf16>,
    return
  }
  func.func @transform_0(%arg0: i32) -> (i32, i32) {
    %c0_i32 = arith.constant 0 : i32
    %c0_i32_0 = arith.constant 0 : i32
    return %arg0, %c0_i32 : i32, i32
  }
  func.func @transform_1(%arg0: i32) -> (i32, i32) {
    %c0_i32 = arith.constant 0 : i32
    %c0_i32_0 = arith.constant 0 : i32
    %c0_i32_1 = arith.constant 0 : i32
    return %c0_i32, %c0_i32_0 : i32, i32
  }
  func.func @transform_2(%arg0: i32) -> (i32, i32) {
    %c0_i32 = arith.constant 0 : i32
    %c0_i32_0 = arith.constant 0 : i32
    %c0_i32_1 = arith.constant 0 : i32
    return %c0_i32, %c0_i32_0 : i32, i32
  }
  func.func @transform_3(%arg0: i32) -> (i32, i32) {
    %c0_i32 = arith.constant 0 : i32
    %c0_i32_0 = arith.constant 0 : i32
    return %arg0, %c0_i32 : i32, i32
  }
}

module attributes {stable_mosaic.version = 11 : i64} {
  func.func @kernel(%arg0: i32, %arg1: i32, %arg2: i32, %arg3: memref<16x32xbf16, #tpu.memory_space<vmem>>, %arg4: memref<32x64xbf16, #tpu.memory_space<vmem>>, %arg5: memref<1x64xf32, #tpu.memory_space<vmem>>, %arg6: memref<16x64xf32, #tpu.memory_space<vmem>>) attributes {dimension_semantics = [#tpu.dimension_semantics<parallel>, #tpu.dimension_semantics<parallel>, #tpu.dimension_semantics<arbitrary>], iteration_bounds = array<i64: 1, 1, 1>, scalar_prefetch = 0 : i64, scratch_operands = 0 : i64, tpu.core_type = #tpu.core_type<tc>, window_params = [{transform_indices = @transform_0, window_bounds = array<i64: 16, 32>}, {transform_indices = @transform_1, window_bounds = array<i64: 32, 64>}, {transform_indices = @transform_2, window_bounds = array<i64: 1, 64>}, {transform_indices = @transform_3, window_bounds = array<i64: 16, 64>}]} {
    %c0 = arith.constant 0 : index
    %c0_0 = arith.constant 0 : index
    %0 = vector.load %arg3[%c0, %c0_0] : memref<16x32xbf16, #tpu.memory_space<vmem>>, vector<16x32xbf16>
    %c0_1 = arith.constant 0 : index
    %c0_2 = arith.constant 0 : index
    %1 = vector.load %arg4[%c0_1, %c0_2] : memref<32x64xbf16, #tpu.memory_space<vmem>>, vector<32x64xbf16>
    %cst = arith.constant dense<0.000000e+00> : vector<16x64xf32>
    %2 = tpu.matmul %0, %1, %cst {dimension_numbers = #tpu.dot_dimension_numbers<[1], [0], [0], [1], [0, 0, 1, 1], [], []>} : vector<16x32xbf16>, vector<32x64xbf16>, vector<16x64xf32> -> vector<16x64xf32>
    %c0_3 = arith.constant 0 : index
    %c0_4 = arith.constant 0 : index
    %3 = vector.load %arg5[%c0_3, %c0_4] : memref<1x64xf32, #tpu.memory_space<vmem>>, vector<1x64xf32>
    %4 = vector.broadcast %3 : vector<1x64xf32> to vector<16x64xf32>
    %5 = arith.addf %2, %4 : vector<16x64xf32>
    %c0_5 = arith.constant 0 : index
    %c0_6 = arith.constant 0 : index
    %6 = vector.load %arg6[%c0_5, %c0_6] : memref<16x64xf32, #tpu.memory_space<vmem>>, vector<16x64xf32>
    tpu.vector_store %arg6[%c0_5, %c0_6], %5 {strides = array<i32>} : memref<16x64xf32, #tpu.memory_space<vmem>>, vector<16x64xf32>,
    return
  }
  func.func @transform_0(%arg0: i32, %arg1: i32, %arg2: i32) -> (i32, i32) {
    %c0_i32 = arith.constant 0 : i32
    return %arg0, %arg2 : i32, i32
  }
  func.func @transform_1(%arg0: i32, %arg1: i32, %arg2: i32) -> (i32, i32) {
    %c0_i32 = arith.constant 0 : i32
    return %arg2, %arg1 : i32, i32
  }
  func.func @transform_2(%arg0: i32, %arg1: i32, %arg2: i32) -> (i32, i32) {
    %c0_i32 = arith.constant 0 : i32
    %c0_i32_0 = arith.constant 0 : i32
    return %c0_i32, %arg1 : i32, i32
  }
  func.func @transform_3(%arg0: i32, %arg1: i32, %arg2: i32) -> (i32, i32) {
    %c0_i32 = arith.constant 0 : i32
    return %arg0, %arg1 : i32, i32
  }
}

</mosaic_0001>

<llo_original>
// kernel: seq2seq_transformer_forward.36
$region0: #{seq2seq_transformer_forward.36}
  #allocation0 [shape = 'u32[]', space=smem, size = 0x4, offset = 0x4, fixed_abs, tag = 'smem constant byte address 0x4 - core index']
  #allocation1 [shape = 'u32[72,128]{1,0:T(1,128)}', space=vmem, size = 0x9000, scoped, tag = 'internal scratch']
  %s0 = inlined_call_operand.vmem [shape: bf16[16,32], index: 0, kind: input, shape index: {}]
  %s1 = inlined_call_operand.vmem [shape: bf16[32,96], index: 1, kind: input, shape index: {}]
  %s2 = inlined_call_operand.vmem [shape: f32[1,96], index: 2, kind: input, shape index: {}]
  %s3 = inlined_call_operand.vmem [shape: bf16[16,96], index: 3, kind: output, shape index: {}]
  %s4 = sld [smem:[#allocation0]]
  $region22: #{seq2seq_transformer_forward.36} parent=0
    _
  %s6 = ssub.s32 1, %s4
  %s7 = scalar_select 0, %s6, %s4
  // Predicated region
  $region2: #{seq2seq_transformer_forward.36} parent=0 // pred_check
    _
  $region3: #{seq2seq_transformer_forward.36} parent=0 // pred_check_branch
    %9 = sbr.rel (0) target = $region5
  $region4: #{seq2seq_transformer_forward.36} parent=0 // pred_region
    _
  $region5: #{seq2seq_transformer_forward.36} parent=0 // pred_fallthru
    _
  // Predicated region
  $region6: #{seq2seq_transformer_forward.36} parent=0 // pred_check
    _
  $region7: #{seq2seq_transformer_forward.36} parent=0 // pred_check_branch
    %11 = sbr.rel (0) target = $region9
  $region8: #{seq2seq_transformer_forward.36} parent=0 // pred_region
    _
  $region9: #{seq2seq_transformer_forward.36} parent=0 // pred_fallthru
    _
  // Predicated region
  $region10: #{seq2seq_transformer_forward.36} parent=0 // pred_check
    _
  $region11: #{seq2seq_transformer_forward.36} parent=0 // pred_check_branch
    %13 = sbr.rel (0) target = $region13
  $region12: #{seq2seq_transformer_forward.36} parent=0 // pred_region
    _
  $region13: #{seq2seq_transformer_forward.36} parent=0 // pred_fallthru
    _
  %v15 = vld [vmem:[%s0] sm:$0xf]
  %v16 = vld [vmem:[%s0 + $0x4] sm:$0xf]
  %v17 = vld [vmem:[%s1] sm:$0xf]
  %v18 = vld [vmem:[%s1 + $0x4] sm:$0xf]
  %v19 = vld [vmem:[%s1 + $0x8] sm:$0xf]
  %v20 = vld [vmem:[%s1 + $0xc] sm:$0xf]
  %v21 = vld [vmem:[%s2] sm:$0x1]
  %v23 = vperm.slane %v21, 0
  %v27 = vunpack.c.l.b16 %v15
  %v28 = vunpack.c.l.b16 %v16
  %v29 = vpack.c.b16 %v28, %v27
  %v34 = vunpack.c.l.b16 %v17
  %v35 = vunpack.c.l.b16 %v18
  %v36 = vunpack.c.l.b16 %v19
  %v37 = vunpack.c.l.b16 %v20
  %v38 = vpack.c.b16 %v35, %v34
  %v39 = vpack.c.b16 %v37, %v36
  %vm42 = vcmask 261120
  %v44 = vsel %vm42, %v29, 0
  %46 = vmatpush.bf16.msra.mxu0 0
  %47 = vmatpush.bf16.msra.mxu0 0
  %48 = vmatpush.bf16.msra.mxu0 0
  %49 = vmatpush.bf16.msra.mxu0 0
  %50 = vmatpush.bf16.msra.mxu0 0
  %51 = vmatpush.bf16.msra.mxu0 0
  %52 = vmatpush.bf16.msra.mxu0 %v39
  %53 = vmatpush.bf16.msra.mxu0 %v38
  %54 = vmatmul.bf16.gmra.mxu0 %v44
  %v55 = vpop.f32.mrf.mxu0
  %v56 = vadd.f32 %v23, %v55
  %v57 = vpop.f32.mrf.mxu0
  %v58 = vadd.f32 %v23, %v57
  %59 = vdwg.mxu0
  %v60 = vpack.c.bf16 %v56, %v56
  %v61 = vpack.c.bf16 %v58, %v58
  %vm62 = vcmask 781312
  %63 = vst.msk [vmem:[%s3] sm:$0xf] %vm62, %v60
  %64 = vst.msk [vmem:[%s3 + $0x4] sm:$0xf] %vm62, %v61
  // Predicated region
  $region14: #{seq2seq_transformer_forward.36} parent=0 // pred_check
    _
  $region15: #{seq2seq_transformer_forward.36} parent=0 // pred_check_branch
    %66 = sbr.rel (0) target = $region17
  $region16: #{seq2seq_transformer_forward.36} parent=0 // pred_region
    _
  $region17: #{seq2seq_transformer_forward.36} parent=0 // pred_fallthru
    _
  // Predicated region
  $region18: #{seq2seq_transformer_forward.36} parent=0 // pred_check
    _
  $region19: #{seq2seq_transformer_forward.36} parent=0 // pred_check_branch
    %68 = sbr.rel (0) target = $region21
  $region20: #{seq2seq_transformer_forward.36} parent=0 // pred_region
    _
  $region21: #{seq2seq_transformer_forward.36} parent=0 // pred_fallthru
    _

// kernel: seq2seq_transformer_forward.39
$region0: #{seq2seq_transformer_forward.39}
  #allocation0 [shape = 'u32[]', space=smem, size = 0x4, offset = 0x4, fixed_abs, tag = 'smem constant byte address 0x4 - core index']
  #allocation1 [shape = 'u32[72,128]{1,0:T(1,128)}', space=vmem, size = 0x9000, scoped, tag = 'internal scratch']
  %s0 = inlined_call_operand.vmem [shape: bf16[16,32], index: 0, kind: input, shape index: {}]
  %s1 = inlined_call_operand.vmem [shape: bf16[32,32], index: 1, kind: input, shape index: {}]
  %s2 = inlined_call_operand.vmem [shape: f32[1,32], index: 2, kind: input, shape index: {}]
  %s3 = inlined_call_operand.vmem [shape: bf16[16,32], index: 3, kind: output, shape index: {}]
  %s4 = sld [smem:[#allocation0]]
  $region22: #{seq2seq_transformer_forward.39} parent=0
    _
  %s6 = ssub.s32 1, %s4
  %s7 = scalar_select 0, %s6, %s4
  // Predicated region
  $region2: #{seq2seq_transformer_forward.39} parent=0 // pred_check
    _
  $region3: #{seq2seq_transformer_forward.39} parent=0 // pred_check_branch
    %9 = sbr.rel (0) target = $region5
  $region4: #{seq2seq_transformer_forward.39} parent=0 // pred_region
    _
  $region5: #{seq2seq_transformer_forward.39} parent=0 // pred_fallthru
    _
  // Predicated region
  $region6: #{seq2seq_transformer_forward.39} parent=0 // pred_check
    _
  $region7: #{seq2seq_transformer_forward.39} parent=0 // pred_check_branch
    %11 = sbr.rel (0) target = $region9
  $region8: #{seq2seq_transformer_forward.39} parent=0 // pred_region
    _
  $region9: #{seq2seq_transformer_forward.39} parent=0 // pred_fallthru
    _
  // Predicated region
  $region10: #{seq2seq_transformer_forward.39} parent=0 // pred_check
    _
  $region11: #{seq2seq_transformer_forward.39} parent=0 // pred_check_branch
    %13 = sbr.rel (0) target = $region13
  $region12: #{seq2seq_transformer_forward.39} parent=0 // pred_region
    _
  $region13: #{seq2seq_transformer_forward.39} parent=0 // pred_fallthru
    _
  %v15 = vld [vmem:[%s0] sm:$0xf]
  %v16 = vld [vmem:[%s0 + $0x4] sm:$0xf]
  %v17 = vld [vmem:[%s1] sm:$0xf]
  %v18 = vld [vmem:[%s1 + $0x4] sm:$0xf]
  %v19 = vld [vmem:[%s1 + $0x8] sm:$0xf]
  %v20 = vld [vmem:[%s1 + $0xc] sm:$0xf]
  %v21 = vld [vmem:[%s2] sm:$0x1]
  %v23 = vperm.slane %v21, 0
  %v27 = vunpack.c.l.b16 %v15
  %v28 = vunpack.c.l.b16 %v16
  %v29 = vpack.c.b16 %v28, %v27
  %v34 = vunpack.c.l.b16 %v17
  %v35 = vunpack.c.l.b16 %v18
  %v36 = vunpack.c.l.b16 %v19
  %v37 = vunpack.c.l.b16 %v20
  %v38 = vpack.c.b16 %v35, %v34
  %v39 = vpack.c.b16 %v37, %v36
  %vm42 = vcmask 261120
  %v44 = vsel %vm42, %v29, 0
  %46 = vmatpush.bf16.msra.mxu0 0
  %47 = vmatpush.bf16.msra.mxu0 0
  %48 = vmatpush.bf16.msra.mxu0 0
  %49 = vmatpush.bf16.msra.mxu0 0
  %50 = vmatpush.bf16.msra.mxu0 0
  %51 = vmatpush.bf16.msra.mxu0 0
  %52 = vmatpush.bf16.msra.mxu0 %v39
  %53 = vmatpush.bf16.msra.mxu0 %v38
  %54 = vmatmul.bf16.gmra.mxu0 %v44
  %v55 = vpop.f32.mrf.mxu0
  %v56 = vadd.f32 %v23, %v55
  %v57 = vpop.f32.mrf.mxu0
  %v58 = vadd.f32 %v23, %v57
  %59 = vdwg.mxu0
  %v60 = vpack.c.bf16 %v56, %v56
  %v61 = vpack.c.bf16 %v58, %v58
  %vm62 = vcmask 257024
  %63 = vst.msk [vmem:[%s3] sm:$0xf] %vm62, %v60
  %64 = vst.msk [vmem:[%s3 + $0x4] sm:$0xf] %vm62, %v61
  // Predicated region
  $region14: #{seq2seq_transformer_forward.39} parent=0 // pred_check
    _
  $region15: #{seq2seq_transformer_forward.39} parent=0 // pred_check_branch
    %66 = sbr.rel (0) target = $region17
  $region16: #{seq2seq_transformer_forward.39} parent=0 // pred_region
    _
  $region17: #{seq2seq_transformer_forward.39} parent=0 // pred_fallthru
    _
  // Predicated region
  $region18: #{seq2seq_transformer_forward.39} parent=0 // pred_check
    _
  $region19: #{seq2seq_transformer_forward.39} parent=0 // pred_check_branch
    %68 = sbr.rel (0) target = $region21
  $region20: #{seq2seq_transformer_forward.39} parent=0 // pred_region
    _
  $region21: #{seq2seq_transformer_forward.39} parent=0 // pred_fallthru
    _

// kernel: seq2seq_transformer_forward.38
$region0: #{seq2seq_transformer_forward.38}
  #allocation0 [shape = 'u32[]', space=smem, size = 0x4, offset = 0x4, fixed_abs, tag = 'smem constant byte address 0x4 - core index']
  #allocation1 [shape = 'u32[72,128]{1,0:T(1,128)}', space=vmem, size = 0x9000, scoped, tag = 'internal scratch']
  %s0 = inlined_call_operand.vmem [shape: bf16[16,32], index: 0, kind: input, shape index: {}]
  %s1 = inlined_call_operand.vmem [shape: bf16[32,32], index: 1, kind: input, shape index: {}]
  %s2 = inlined_call_operand.vmem [shape: f32[1,32], index: 2, kind: input, shape index: {}]
  %s3 = inlined_call_operand.vmem [shape: bf16[16,32], index: 3, kind: input, shape index: {}]
  %s4 = inlined_call_operand.vmem [shape: f32[1,32], index: 4, kind: input, shape index: {}]
  %s5 = inlined_call_operand.vmem [shape: f32[1,32], index: 5, kind: input, shape index: {}]
  %s6 = inlined_call_operand.vmem [shape: bf16[16,32], index: 6, kind: output, shape index: {}]
  %s7 = sld [smem:[#allocation0]]
  $region34: #{seq2seq_transformer_forward.38} parent=0
    _
  %s9 = ssub.s32 1, %s7
  %s10 = scalar_select 0, %s9, %s7
  // Predicated region
  $region2: #{seq2seq_transformer_forward.38} parent=0 // pred_check
    _
  $region3: #{seq2seq_transformer_forward.38} parent=0 // pred_check_branch
    %12 = sbr.rel (0) target = $region5
  $region4: #{seq2seq_transformer_forward.38} parent=0 // pred_region
    _
  $region5: #{seq2seq_transformer_forward.38} parent=0 // pred_fallthru
    _
  // Predicated region
  $region6: #{seq2seq_transformer_forward.38} parent=0 // pred_check
    _
  $region7: #{seq2seq_transformer_forward.38} parent=0 // pred_check_branch
    %14 = sbr.rel (0) target = $region9
  $region8: #{seq2seq_transformer_forward.38} parent=0 // pred_region
    _
  $region9: #{seq2seq_transformer_forward.38} parent=0 // pred_fallthru
    _
  // Predicated region
  $region10: #{seq2seq_transformer_forward.38} parent=0 // pred_check
    _
  $region11: #{seq2seq_transformer_forward.38} parent=0 // pred_check_branch
    %16 = sbr.rel (0) target = $region13
  $region12: #{seq2seq_transformer_forward.38} parent=0 // pred_region
    _
  $region13: #{seq2seq_transformer_forward.38} parent=0 // pred_fallthru
    _
  // Predicated region
  $region14: #{seq2seq_transformer_forward.38} parent=0 // pred_check
    _
  $region15: #{seq2seq_transformer_forward.38} parent=0 // pred_check_branch
    %18 = sbr.rel (0) target = $region17
  $region16: #{seq2seq_transformer_forward.38} parent=0 // pred_region
    _
  $region17: #{seq2seq_transformer_forward.38} parent=0 // pred_fallthru
    _
  // Predicated region
  $region18: #{seq2seq_transformer_forward.38} parent=0 // pred_check
    _
  $region19: #{seq2seq_transformer_forward.38} parent=0 // pred_check_branch
    %20 = sbr.rel (0) target = $region21
  $region20: #{seq2seq_transformer_forward.38} parent=0 // pred_region
    _
  $region21: #{seq2seq_transformer_forward.38} parent=0 // pred_fallthru
    _
  // Predicated region
  $region22: #{seq2seq_transformer_forward.38} parent=0 // pred_check
    _
  $region23: #{seq2seq_transformer_forward.38} parent=0 // pred_check_branch
    %22 = sbr.rel (0) target = $region25
  $region24: #{seq2seq_transformer_forward.38} parent=0 // pred_region
    _
  $region25: #{seq2seq_transformer_forward.38} parent=0 // pred_fallthru
    _
  %v24 = vld [vmem:[%s0] sm:$0xf]
  %v25 = vld [vmem:[%s0 + $0x4] sm:$0xf]
  %v26 = vld [vmem:[%s1] sm:$0xf]
  %v27 = vld [vmem:[%s1 + $0x4] sm:$0xf]
  %v28 = vld [vmem:[%s1 + $0x8] sm:$0xf]
  %v29 = vld [vmem:[%s1 + $0xc] sm:$0xf]
  %v30 = vld [vmem:[%s2] sm:$0x1]
  %v32 = vperm.slane %v30, 0
  %v36 = vunpack.c.l.b16 %v24
  %v37 = vunpack.c.l.b16 %v25
  %v38 = vpack.c.b16 %v37, %v36
  %v43 = vunpack.c.l.b16 %v26
  %v44 = vunpack.c.l.b16 %v27
  %v45 = vunpack.c.l.b16 %v28
  %v46 = vunpack.c.l.b16 %v29
  %v47 = vpack.c.b16 %v44, %v43
  %v48 = vpack.c.b16 %v46, %v45
  %vm51 = vcmask 261120
  %v53 = vsel %vm51, %v38, 0
  %55 = vmatpush.bf16.msra.mxu0 0
  %56 = vmatpush.bf16.msra.mxu0 0
  %57 = vmatpush.bf16.msra.mxu0 0
  %58 = vmatpush.bf16.msra.mxu0 0
  %59 = vmatpush.bf16.msra.mxu0 0
  %60 = vmatpush.bf16.msra.mxu0 0
  %61 = vmatpush.bf16.msra.mxu0 %v48
  %62 = vmatpush.bf16.msra.mxu0 %v47
  %63 = vmatmul.bf16.gmra.mxu0 %v53
  %v64 = vpop.f32.mrf.mxu0
  %v65 = vadd.f32 %v32, %v64
  %v66 = vpop.f32.mrf.mxu0
  %v67 = vadd.f32 %v32, %v66
  %68 = vdwg.mxu0
  %v69 = vld [vmem:[%s3] sm:$0xf]
  %v70 = vld [vmem:[%s3 + $0x4] sm:$0xf]
  %v71 = vunpack.c.l.bf16 %v69
  %v72 = vunpack.c.l.bf16 %v70
  %v73 = vadd.f32 %v65, %v71
  %v74 = vadd.f32 %v67, %v72
  %v75 = vld [vmem:[%s4] sm:$0x1]
  %v76 = vld [vmem:[%s5] sm:$0x1]
  %v77 = vsel %vm51, %v73, 0.0
  %78 = vadd.xlane.f32.xlu0 %v77
  %v79 = vpop.xlane.xlu0 %78
  %v80 = vsel %vm51, %v74, 0.0
  %81 = vadd.xlane.f32.xlu0 %v80
  %v82 = vpop.xlane.xlu0 %81
  %v83 = vrcp.pop 32.0
  %v84 = vmul.f32 32.0, %v83
  %v85 = vsub.f32 1.0, %v84
  %v86 = vmul.f32 %v83, %v85
  %v87 = vadd.f32 %v83, %v86
  %vm88 = vweird.f32 %v83
  %v89 = vsel %vm88, %v83, %v87
  %v90 = vmul.f32 %v79, %v89
  %v91 = vmul.f32 %v82, %v89
  %v92 = vsub.f32 %v73, %v90
  %v93 = vsub.f32 %v74, %v91
  %v94 = vmul.f32 %v92, %v92
  %v95 = vmul.f32 %v93, %v93
  %v96 = vsel %vm51, %v94, 0.0
  %97 = vadd.xlane.f32.xlu0 %v96
  %v98 = vpop.xlane.xlu0 %97
  %v99 = vsel %vm51, %v95, 0.0
  %100 = vadd.xlane.f32.xlu0 %v99
  %v101 = vpop.xlane.xlu0 %100
  %v102 = vmul.f32 %v98, %v89
  %v103 = vmul.f32 %v101, %v89
  %v104 = vadd.f32 %v102, 1e-05
  %v105 = vadd.f32 %v103, 1e-05
  %v106 = vrsqrt.pop %v104
  %v107 = vmul.f32 %v106, %v104
  %v108 = vmul.f32 %v107, %v106
  %v109 = vmul.f32 0.5, %v108
  %v110 = vsub.f32 1.5, %v109
  %v111 = vmul.f32 %v106, %v110
  %vm112 = vweird.f32 %v104
  %vm113 = vweird.f32 %v106
  %vm114 = vmor %vm112, %vm113
  %v115 = vsel %vm114, %v106, %v111
  %v116 = vrsqrt.pop %v105
  %v117 = vmul.f32 %v116, %v105
  %v118 = vmul.f32 %v117, %v116
  %v119 = vmul.f32 0.5, %v118
  %v120 = vsub.f32 1.5, %v119
  %v121 = vmul.f32 %v116, %v120
  %vm122 = vweird.f32 %v105
  %vm123 = vweird.f32 %v116
  %vm124 = vmor %vm122, %vm123
  %v125 = vsel %vm124, %v116, %v121
  %v126 = vmul.f32 %v92, %v115
  %v127 = vmul.f32 %v93, %v125
  %v129 = vperm.slane %v75, 0
  %v131 = vmul.f32 %v126, %v129
  %v132 = vmul.f32 %v127, %v129
  %v134 = vperm.slane %v76, 0
  %v136 = vadd.f32 %v131, %v134
  %v137 = vadd.f32 %v132, %v134
  %v138 = vpack.c.bf16 %v136, %v136
  %v139 = vpack.c.bf16 %v137, %v137
  %vm140 = vcmask 257024
  %141 = vst.msk [vmem:[%s6] sm:$0xf] %vm140, %v138
  %142 = vst.msk [vmem:[%s6 + $0x4] sm:$0xf] %vm140, %v139
  // Predicated region
  $region26: #{seq2seq_transformer_forward.38} parent=0 // pred_check
    _
  $region27: #{seq2seq_transformer_forward.38} parent=0 // pred_check_branch
    %144 = sbr.rel (0) target = $region29
  $region28: #{seq2seq_transformer_forward.38} parent=0 // pred_region
    _
  $region29: #{seq2seq_transformer_forward.38} parent=0 // pred_fallthru
    _
  // Predicated region
  $region30: #{seq2seq_transformer_forward.38} parent=0 // pred_check
    _
  $region31: #{seq2seq_transformer_forward.38} parent=0 // pred_check_branch
    %146 = sbr.rel (0) target = $region33
  $region32: #{seq2seq_transformer_forward.38} parent=0 // pred_region
    _
  $region33: #{seq2seq_transformer_forward.38} parent=0 // pred_fallthru
    _

// kernel: seq2seq_transformer_forward.37
$region0: #{seq2seq_transformer_forward.37}
  #allocation0 [shape = 'u32[]', space=smem, size = 0x4, offset = 0x4, fixed_abs, tag = 'smem constant byte address 0x4 - core index']
  #allocation1 [shape = 'u32[72,128]{1,0:T(1,128)}', space=vmem, size = 0x9000, scoped, tag = 'internal scratch']
  #allocation2 [shape = 'f32[4,8,1]{2,1,0:T(8,128)}', space=vmem, size = 0x4000, scoped, tag = 'scratch operand']
  #allocation3 [shape = 'f32[4,8,1]{2,1,0:T(8,128)}', space=vmem, size = 0x4000, scoped, tag = 'scratch operand']
  #allocation4 [shape = 'f32[4,8,8]{2,1,0:T(8,128)}', space=vmem, size = 0x4000, scoped, tag = 'scratch operand']
  %s0 = inlined_call_operand.vmem [shape: bf16[2,4,8,8], index: 0, kind: input, shape index: {}]
  %s1 = inlined_call_operand.vmem [shape: bf16[2,4,8,8], index: 1, kind: input, shape index: {}]
  %s2 = inlined_call_operand.vmem [shape: bf16[2,4,8,8], index: 2, kind: input, shape index: {}]
  %s3 = inlined_call_operand.vmem [shape: f32[8,8], index: 3, kind: input, shape index: {}]
  %s4 = inlined_call_operand.vmem [shape: f32[2,1,8], index: 4, kind: input, shape index: {}]
  %s5 = inlined_call_operand.vmem [shape: bf16[2,4,8,8], index: 5, kind: output, shape index: {}]
  %s6 = sld [smem:[#allocation0]]
  $region61: #{seq2seq_transformer_forward.37} parent=0
    _
  %s8 = ssub.s32 1, %s6
  %s9 = scalar_select 0, %s8, %s6
  loop: start=0, step=1, limit=4
  $region2: #{seq2seq_transformer_forward.37} parent=0 // loop_pre_header
    _
  $region3: #{seq2seq_transformer_forward.37} parent=0 // loop_header
    %s11 = sphi 0, %s15
    %p12 = scmp.ge.s32.totalorder %s11, 4
    %s18 = sphi 0, %s37
    %s19 = sphi 0, %s33
    %s20 = sphi 0, %s29
    %s21 = sphi 0, %s18
    %s22 = sphi 0, %s19
    %s23 = sphi 0, %s20
    %s24 = sphi 0, %s21
    %s25 = sphi 0, %s22
    %s26 = sphi 0, %s23
    %s42 = sphi 0, %s44
    %s45 = sphi 0, %s42
    %s46 = sphi 0, %s45
    %s62 = sphi 0, %s46
    %s70 = sphi 0, %s72
    %s73 = sphi 0, %s70
    %s74 = sphi 0, %s73
    %s90 = sphi 0, %s74
    %s98 = sphi 0, %s100
    %s101 = sphi 0, %s98
    %s102 = sphi 0, %s101
    %s118 = sphi 0, %s102
    %s126 = sphi 0, %s128
    %s129 = sphi 0, %s126
    %s130 = sphi 0, %s129
    %s146 = sphi 0, %s130
    %s154 = sphi 0, %s156
    %s157 = sphi 0, %s154
    %s158 = sphi 0, %s157
    %s174 = sphi 0, %s158
    %s182 = sphi 0, %s184
    %s185 = sphi 0, %s182
    %s186 = sphi 0, %s185
    %s202 = sphi 0, %s186
  $region4: #{seq2seq_transformer_forward.37} parent=0 // loop_header_branch
    %14 = sbr.rel (%p12) target = $region8
  $region5: #{seq2seq_transformer_forward.37} parent=0 // loop_body
    %s16 = ssub.s32 %s11, 1
    %s17 = ssub.s32 %s11, 2
    %s27 = sadd.s32 1, %s20
    %p28 = scmp.ge.s32.totalorder %s27, 1
    %s29 = scalar_select %p28, 0, %s27
    %s30 = sadd.s32 1, %s19
    %s31 = scalar_select %p28, %s30, %s19
    %p32 = scmp.ge.s32.totalorder %s31, 1
    %s33 = scalar_select %p32, 0, %s31
    %s34 = sadd.s32 1, %s18
    %s35 = scalar_select %p32, %s34, %s18
    %p36 = scmp.ge.s32.totalorder %s35, 2
    %s37 = scalar_select %p36, 0, %s35
    %s38 = ssub.s32 %s18, %s37
    %s39 = ssub.s32 %s19, %s33
    %s40 = sor.u32 %s38, %s39
    %p41 = scmp.eq.s32.totalorder %s40, 0
    %s43 = sadd.s32 %s42, 1
    %s44 = scalar_select %p41, %s42, %s43
    %p47 = pneg %p41
    %p48 = scmp.eq.s32.totalorder %s11, 1
    %p49 = por %p47, %p48
    %p50 = scmp.ne.s32.totalorder %s42, %s45
    %p51 = scmp.eq.s32.totalorder %s11, 0
    %p52 = por %p50, %p51
    %p53 = scmp.ne.s32.totalorder %s42, %s45
    %p54 = scmp.eq.s32.totalorder %s16, 1
    %p55 = por %p53, %p54
    %p56 = scmp.ne.s32.totalorder %s45, %s46
    %p57 = scmp.eq.s32.totalorder %s16, 0
    %p58 = por %p56, %p57
    %p59 = scmp.ne.s32.totalorder %s45, %s46
    %p60 = scmp.eq.s32.totalorder %s17, 1
    %p61 = por %p59, %p60
    %p63 = scmp.ne.s32.totalorder %s46, %s62
    %p64 = scmp.eq.s32.totalorder %s17, 0
    %p65 = por %p63, %p64
    %s66 = ssub.s32 %s18, %s37
    %s67 = ssub.s32 %s20, %s29
    %s68 = sor.u32 %s66, %s67
    %p69 = scmp.eq.s32.totalorder %s68, 0
    %s71 = sadd.s32 %s70, 1
    %s72 = scalar_select %p69, %s70, %s71
    %p75 = pneg %p69
    %p76 = scmp.eq.s32.totalorder %s11, 1
    %p77 = por %p75, %p76
    %p78 = scmp.ne.s32.totalorder %s70, %s73
    %p79 = scmp.eq.s32.totalorder %s11, 0
    %p80 = por %p78, %p79
    %p81 = scmp.ne.s32.totalorder %s70, %s73
    %p82 = scmp.eq.s32.totalorder %s16, 1
    %p83 = por %p81, %p82
    %p84 = scmp.ne.s32.totalorder %s73, %s74
    %p85 = scmp.eq.s32.totalorder %s16, 0
    %p86 = por %p84, %p85
    %p87 = scmp.ne.s32.totalorder %s73, %s74
    %p88 = scmp.eq.s32.totalorder %s17, 1
    %p89 = por %p87, %p88
    %p91 = scmp.ne.s32.totalorder %s74, %s90
    %p92 = scmp.eq.s32.totalorder %s17, 0
    %p93 = por %p91, %p92
    %s94 = ssub.s32 %s18, %s37
    %s95 = ssub.s32 %s20, %s29
    %s96 = sor.u32 %s94, %s95
    %p97 = scmp.eq.s32.totalorder %s96, 0
    %s99 = sadd.s32 %s98, 1
    %s100 = scalar_select %p97, %s98, %s99
    %p103 = pneg %p97
    %p104 = scmp.eq.s32.totalorder %s11, 1
    %p105 = por %p103, %p104
    %p106 = scmp.ne.s32.totalorder %s98, %s101
    %p107 = scmp.eq.s32.totalorder %s11, 0
    %p108 = por %p106, %p107
    %p109 = scmp.ne.s32.totalorder %s98, %s101
    %p110 = scmp.eq.s32.totalorder %s16, 1
    %p111 = por %p109, %p110
    %p112 = scmp.ne.s32.totalorder %s101, %s102
    %p113 = scmp.eq.s32.totalorder %s16, 0
    %p114 = por %p112, %p113
    %p115 = scmp.ne.s32.totalorder %s101, %s102
    %p116 = scmp.eq.s32.totalorder %s17, 1
    %p117 = por %p115, %p116
    %p119 = scmp.ne.s32.totalorder %s102, %s118
    %p120 = scmp.eq.s32.totalorder %s17, 0
    %p121 = por %p119, %p120
    %s122 = ssub.s32 %s19, %s33
    %s123 = ssub.s32 %s20, %s29
    %s124 = sor.u32 %s122, %s123
    %p125 = scmp.eq.s32.totalorder %s124, 0
    %s127 = sadd.s32 %s126, 1
    %s128 = scalar_select %p125, %s126, %s127
    %p131 = pneg %p125
    %p132 = scmp.eq.s32.totalorder %s11, 1
    %p133 = por %p131, %p132
    %p134 = scmp.ne.s32.totalorder %s126, %s129
    %p135 = scmp.eq.s32.totalorder %s11, 0
    %p136 = por %p134, %p135
    %p137 = scmp.ne.s32.totalorder %s126, %s129
    %p138 = scmp.eq.s32.totalorder %s16, 1
    %p139 = por %p137, %p138
    %p140 = scmp.ne.s32.totalorder %s129, %s130
    %p141 = scmp.eq.s32.totalorder %s16, 0
    %p142 = por %p140, %p141
    %p143 = scmp.ne.s32.totalorder %s129, %s130
    %p144 = scmp.eq.s32.totalorder %s17, 1
    %p145 = por %p143, %p144
    %p147 = scmp.ne.s32.totalorder %s130, %s146
    %p148 = scmp.eq.s32.totalorder %s17, 0
    %p149 = por %p147, %p148
    %s150 = ssub.s32 %s18, %s37
    %s151 = ssub.s32 %s20, %s29
    %s152 = sor.u32 %s150, %s151
    %p153 = scmp.eq.s32.totalorder %s152, 0
    %s155 = sadd.s32 %s154, 1
    %s156 = scalar_select %p153, %s154, %s155
    %p159 = pneg %p153
    %p160 = scmp.eq.s32.totalorder %s11, 1
    %p161 = por %p159, %p160
    %p162 = scmp.ne.s32.totalorder %s154, %s157
    %p163 = scmp.eq.s32.totalorder %s11, 0
    %p164 = por %p162, %p163
    %p165 = scmp.ne.s32.totalorder %s154, %s157
    %p166 = scmp.eq.s32.totalorder %s16, 1
    %p167 = por %p165, %p166
    %p168 = scmp.ne.s32.totalorder %s157, %s158
    %p169 = scmp.eq.s32.totalorder %s16, 0
    %p170 = por %p168, %p169
    %p171 = scmp.ne.s32.totalorder %s157, %s158
    %p172 = scmp.eq.s32.totalorder %s17, 1
    %p173 = por %p171, %p172
    %p175 = scmp.ne.s32.totalorder %s158, %s174
    %p176 = scmp.eq.s32.totalorder %s17, 0
    %p177 = por %p175, %p176
    %s178 = ssub.s32 %s18, %s37
    %s179 = ssub.s32 %s19, %s33
    %s180 = sor.u32 %s178, %s179
    %p181 = scmp.eq.s32.totalorder %s180, 0
    %s183 = sadd.s32 %s182, 1
    %s184 = scalar_select %p181, %s182, %s183
    %p187 = pneg %p181
    %p188 = scmp.eq.s32.totalorder %s11, 1
    %p189 = por %p187, %p188
    %p190 = scmp.ne.s32.totalorder %s182, %s185
    %p191 = scmp.eq.s32.totalorder %s11, 0
    %p192 = por %p190, %p191
    %p193 = scmp.ne.s32.totalorder %s182, %s185
    %p194 = scmp.eq.s32.totalorder %s16, 1
    %p195 = por %p193, %p194
    %p196 = scmp.ne.s32.totalorder %s185, %s186
    %p197 = scmp.eq.s32.totalorder %s16, 0
    %p198 = por %p196, %p197
    %p199 = scmp.ne.s32.totalorder %s185, %s186
    %p200 = scmp.eq.s32.totalorder %s17, 1
    %p201 = por %p199, %p200
    %p203 = scmp.ne.s32.totalorder %s186, %s202
    %p204 = scmp.eq.s32.totalorder %s17, 0
    %p205 = por %p203, %p204
    %p206 = scmp.le.s32.totalorder 1, %s11
    %p207 = scmp.lt.s32.totalorder %s11, 3
    %p208 = pnand %p206, %p207
    %p209 = pneg %p208
    // Predicated region
    $region9: #{seq2seq_transformer_forward.37} parent=5 // pred_check
      _
    $region10: #{seq2seq_transformer_forward.37} parent=5 // pred_check_branch
      %211 = sbr.rel (%p208) target = $region12
    $region11: #{seq2seq_transformer_forward.37} parent=5 // pred_region
      %s212 = ssub.s32 %s11, 1
      // Predicated region
      $region13: #{seq2seq_transformer_forward.37} parent=11 // pred_check
        %p213 = pneg %p142
      $region14: #{seq2seq_transformer_forward.37} parent=11 // pred_check_branch
        %215 = sbr.rel (%p213) target = $region16
      $region15: #{seq2seq_transformer_forward.37} parent=11 // pred_region
        %p216 = scmp.lt.s32.totalorder %s22, 0
        %s217 = scalar_select %p216, %s22, 0
        %p218 = scmp.lt.s32.totalorder %s23, 0
        %s219 = scalar_select %p218, %s23, 0
        %s220 = sadd.s32 %s219, %s217
        %s221 = smul.addr %s220, 8
        %s222 = scalar_lea.vmem %s3, %s221
      $region16: #{seq2seq_transformer_forward.37} parent=11 // pred_fallthru
        _
    $region12: #{seq2seq_transformer_forward.37} parent=5 // pred_fallthru
      _
    %p223 = scmp.lt.s32.totalorder %s11, 2
    // Predicated region
    $region17: #{seq2seq_transformer_forward.37} parent=5 // pred_check
      %p224 = pneg %p223
    $region18: #{seq2seq_transformer_forward.37} parent=5 // pred_check_branch
      %226 = sbr.rel (%p224) target = $region20
    $region19: #{seq2seq_transformer_forward.37} parent=5 // pred_region
      // Predicated region
      $region21: #{seq2seq_transformer_forward.37} parent=19 // pred_check
        %p227 = pneg %p52
      $region22: #{seq2seq_transformer_forward.37} parent=19 // pred_check_branch
        %229 = sbr.rel (%p227) target = $region24
      $region23: #{seq2seq_transformer_forward.37} parent=19 // pred_region
        %p230 = scmp.lt.s32.totalorder %s18, 1
        %s231 = scalar_select %p230, %s18, 1
        %p232 = scmp.lt.s32.totalorder %s19, 0
        %s233 = scalar_select %p232, %s19, 0
        %s234 = smul.addr %s231, 4
        %s235 = sadd.s32 %s233, %s234
        %s236 = smul.addr %s235, 4
        %s237 = scalar_lea.vmem %s0, %s236
      $region24: #{seq2seq_transformer_forward.37} parent=19 // pred_fallthru
        _
      // Predicated region
      $region25: #{seq2seq_transformer_forward.37} parent=19 // pred_check
        %p238 = pneg %p80
      $region26: #{seq2seq_transformer_forward.37} parent=19 // pred_check_branch
        %240 = sbr.rel (%p238) target = $region28
      $region27: #{seq2seq_transformer_forward.37} parent=19 // pred_region
        %p241 = scmp.lt.s32.totalorder %s18, 1
        %s242 = scalar_select %p241, %s18, 1
        %p243 = scmp.lt.s32.totalorder %s20, 0
        %s244 = scalar_select %p243, %s20, 0
        %s245 = smul.addr %s242, 4
        %s246 = sadd.s32 %s244, %s245
        %s247 = smul.addr %s246, 4
        %s248 = scalar_lea.vmem %s1, %s247
      $region28: #{seq2seq_transformer_forward.37} parent=19 // pred_fallthru
        _
      // Predicated region
      $region29: #{seq2seq_transformer_forward.37} parent=19 // pred_check
        %p249 = pneg %p108
      $region30: #{seq2seq_transformer_forward.37} parent=19 // pred_check_branch
        %251 = sbr.rel (%p249) target = $region32
      $region31: #{seq2seq_transformer_forward.37} parent=19 // pred_region
        %p252 = scmp.lt.s32.totalorder %s18, 1
        %s253 = scalar_select %p252, %s18, 1
        %p254 = scmp.lt.s32.totalorder %s20, 0
        %s255 = scalar_select %p254, %s20, 0
        %s256 = smul.addr %s253, 4
        %s257 = sadd.s32 %s255, %s256
        %s258 = smul.addr %s257, 4
        %s259 = scalar_lea.vmem %s2, %s258
      $region32: #{seq2seq_transformer_forward.37} parent=19 // pred_fallthru
        _
      // Predicated region
      $region33: #{seq2seq_transformer_forward.37} parent=19 // pred_check
        %p260 = pneg %p164
      $region34: #{seq2seq_transformer_forward.37} parent=19 // pred_check_branch
        %262 = sbr.rel (%p260) target = $region36
      $region35: #{seq2seq_transformer_forward.37} parent=19 // pred_region
        %p263 = scmp.lt.s32.totalorder %s18, 1
        %s264 = scalar_select %p263, %s18, 1
        %p265 = scmp.lt.s32.totalorder %s20, 0
        %s266 = scalar_select %p265, %s20, 0
        %s267 = sadd.s32 %s266, %s264
        %s268 = scalar_lea.vmem %s4, %s267
      $region36: #{seq2seq_transformer_forward.37} parent=19 // pred_fallthru
        _
    $region20: #{seq2seq_transformer_forward.37} parent=5 // pred_fallthru
      _
    %p269 = scmp.le.s32.totalorder 1, %s11
    %p270 = scmp.lt.s32.totalorder %s11, 3
    %p271 = pnand %p269, %p270
    %p272 = pneg %p271
    // Predicated region
    $region37: #{seq2seq_transformer_forward.37} parent=5 // pred_check
      _
    $region38: #{seq2seq_transformer_forward.37} parent=5 // pred_check_branch
      %274 = sbr.rel (%p271) target = $region40
    $region39: #{seq2seq_transformer_forward.37} parent=5 // pred_region
      %s275 = ssub.s32 %s11, 1
      %p276 = scmp.lt.s32.totalorder %s21, 1
      %s277 = scalar_select %p276, %s21, 1
      %p278 = scmp.lt.s32.totalorder %s22, 0
      %s279 = scalar_select %p278, %s22, 0
      %s280 = smul.addr %s277, 4
      %s281 = sadd.s32 %s279, %s280
      %s282 = smul.addr %s281, 4
      %s283 = scalar_lea.vmem %s0, %s282
      %p284 = pneg %p58
      %p285 = pneg %p55
      %p286 = scmp.lt.s32.totalorder %s21, 1
      %s287 = scalar_select %p286, %s21, 1
      %p288 = scmp.lt.s32.totalorder %s23, 0
      %s289 = scalar_select %p288, %s23, 0
      %s290 = smul.addr %s287, 4
      %s291 = sadd.s32 %s289, %s290
      %s292 = smul.addr %s291, 4
      %s293 = scalar_lea.vmem %s1, %s292
      %p294 = pneg %p86
      %p295 = pneg %p83
      %p296 = scmp.lt.s32.totalorder %s21, 1
      %s297 = scalar_select %p296, %s21, 1
      %p298 = scmp.lt.s32.totalorder %s23, 0
      %s299 = scalar_select %p298, %s23, 0
      %s300 = smul.addr %s297, 4
      %s301 = sadd.s32 %s299, %s300
      %s302 = smul.addr %s301, 4
      %s303 = scalar_lea.vmem %s2, %s302
      %p304 = pneg %p114
      %p305 = pneg %p111
      %p306 = scmp.lt.s32.totalorder %s22, 0
      %s307 = scalar_select %p306, %s22, 0
      %p308 = scmp.lt.s32.totalorder %s23, 0
      %s309 = scalar_select %p308, %s23, 0
      %s310 = sadd.s32 %s309, %s307
      %s311 = smul.addr %s310, 8
      %s312 = scalar_lea.vmem %s3, %s311
      %p313 = pneg %p142
      %p314 = pneg %p139
      %p315 = scmp.lt.s32.totalorder %s21, 1
      %s316 = scalar_select %p315, %s21, 1
      %p317 = scmp.lt.s32.totalorder %s23, 0
      %s318 = scalar_select %p317, %s23, 0
      %s319 = sadd.s32 %s318, %s316
      %s320 = scalar_lea.vmem %s4, %s319
      %p321 = pneg %p170
      %p322 = pneg %p167
      %p323 = pneg %p198
      %p324 = pneg %p195
      %p325 = scmp.lt.s32.totalorder %s21, 1
      %s326 = scalar_select %p325, %s21, 1
      %p327 = scmp.lt.s32.totalorder %s22, 0
      %s328 = scalar_select %p327, %s22, 0
      %s329 = smul.addr %s326, 4
      %s330 = sadd.s32 %s328, %s329
      %s331 = smul.addr %s330, 4
      %s332 = scalar_lea.vmem %s5, %s331
      %p333 = scmp.lt.s32.totalorder %s21, 1
      %s334 = scalar_select %p333, %s21, 1
      %p335 = scmp.lt.s32.totalorder %s22, 0
      %s336 = scalar_select %p335, %s22, 0
      %s337 = smul.addr %s334, 4
      %s338 = sadd.s32 %s336, %s337
      %s339 = smul.addr %s338, 4
      %s340 = scalar_lea.vmem %s0, %s339
      %p341 = scmp.lt.s32.totalorder %s21, 1
      %s342 = scalar_select %p341, %s21, 1
      %p343 = scmp.lt.s32.totalorder %s23, 0
      %s344 = scalar_select %p343, %s23, 0
      %s345 = smul.addr %s342, 4
      %s346 = sadd.s32 %s344, %s345
      %s347 = smul.addr %s346, 4
      %s348 = scalar_lea.vmem %s1, %s347
      %p349 = scmp.lt.s32.totalorder %s21, 1
      %s350 = scalar_select %p349, %s21, 1
      %p351 = scmp.lt.s32.totalorder %s23, 0
      %s352 = scalar_select %p351, %s23, 0
      %s353 = smul.addr %s350, 4
      %s354 = sadd.s32 %s352, %s353
      %s355 = smul.addr %s354, 4
      %s356 = scalar_lea.vmem %s2, %s355
      %p357 = scmp.lt.s32.totalorder %s22, 0
      %s358 = scalar_select %p357, %s22, 0
      %p359 = scmp.lt.s32.totalorder %s23, 0
      %s360 = scalar_select %p359, %s23, 0
      %s361 = sadd.s32 %s360, %s358
      %s362 = smul.addr %s361, 8
      %s363 = scalar_lea.vmem %s3, %s362
      %p364 = scmp.lt.s32.totalorder %s21, 1
      %s365 = scalar_select %p364, %s21, 1
      %p366 = scmp.lt.s32.totalorder %s23, 0
      %s367 = scalar_select %p366, %s23, 0
      %s368 = sadd.s32 %s367, %s365
      %s369 = scalar_lea.vmem %s4, %s368
      %p370 = scmp.lt.s32.totalorder %s21, 1
      %s371 = scalar_select %p370, %s21, 1
      %p372 = scmp.lt.s32.totalorder %s22, 0
      %s373 = scalar_select %p372, %s22, 0
      %s374 = smul.addr %s371, 4
      %s375 = sadd.s32 %s373, %s374
      %s376 = smul.addr %s375, 4
      %s377 = scalar_lea.vmem %s5, %s376
      %p379 = scmp.eq.s32.totalorder %s23, 0
      // Predicated region
      $region41: #{seq2seq_transformer_forward.37} parent=39 // pred_check
        %p380 = pneg %p379
      $region42: #{seq2seq_transformer_forward.37} parent=39 // pred_check_branch
        %382 = sbr.rel (%p380) target = $region44
      $region43: #{seq2seq_transformer_forward.37} parent=39 // pred_region
        %vm383 = vcmask 7168
        %384 = vst.msk [vmem:[#allocation2] sm:$0xff] %vm383, -inf
        %385 = vst.msk [vmem:[#allocation2 + $0x8] sm:$0xff] %vm383, -inf
        %386 = vst.msk [vmem:[#allocation2 + $0x10] sm:$0xff] %vm383, -inf
        %387 = vst.msk [vmem:[#allocation2 + $0x18] sm:$0xff] %vm383, -inf
        %388 = vst.msk [vmem:[#allocation3] sm:$0xff] %vm383, 0.0
        %389 = vst.msk [vmem:[#allocation3 + $0x8] sm:$0xff] %vm383, 0.0
        %390 = vst.msk [vmem:[#allocation3 + $0x10] sm:$0xff] %vm383, 0.0
        %391 = vst.msk [vmem:[#allocation3 + $0x18] sm:$0xff] %vm383, 0.0
        %vm392 = vcmask 64512
        %393 = vst.msk [vmem:[#allocation4] sm:$0xff] %vm392, 0.0
        %394 = vst.msk [vmem:[#allocation4 + $0x8] sm:$0xff] %vm392, 0.0
        %395 = vst.msk [vmem:[#allocation4 + $0x10] sm:$0xff] %vm392, 0.0
        %396 = vst.msk [vmem:[#allocation4 + $0x18] sm:$0xff] %vm392, 0.0
      $region44: #{seq2seq_transformer_forward.37} parent=39 // pred_fallthru
        _
      %v397 = vld [vmem:[%s340] sm:$0xf]
      %v398 = vld [vmem:[%s340 + $0x4] sm:$0xf]
      %v399 = vld [vmem:[%s340 + $0x8] sm:$0xf]
      %v400 = vld [vmem:[%s340 + $0xc] sm:$0xf]
      %v401 = vld [vmem:[%s348] sm:$0xf]
      %v402 = vld [vmem:[%s348 + $0x4] sm:$0xf]
      %v403 = vld [vmem:[%s348 + $0x8] sm:$0xf]
      %v404 = vld [vmem:[%s348 + $0xc] sm:$0xf]
      %vm405 = vcmask 64512
      %v407 = vsel %vm405, %v397, 0
      %v410 = vsel %vm405, %v401, 0
      %412 = vmatpush.bf16.xpose.msra.mxu0 0
      %413 = vmatpush.bf16.xpose.msra.mxu0 0
      %414 = vmatpush.bf16.xpose.msra.mxu0 0
      %415 = vmatpush.bf16.xpose.msra.mxu0 0
      %416 = vmatpush.bf16.xpose.msra.mxu0 0
      %417 = vmatpush.bf16.xpose.msra.mxu0 0
      %418 = vmatpush.bf16.xpose.msra.mxu0 0
      %419 = vmatpush.bf16.xpose.msra.mxu0 %v410
      %420 = vmatmul.bf16.gmra.mxu0 %v407
      %v421 = vpop.f32.mrf.mxu0
      %v422 = vadd.f32 0.0, %v421
      %v423 = vpop.f32.mrf.mxu0
      %424 = vdwg.mxu0
      %v426 = vsel %vm405, %v398, 0
      %v429 = vsel %vm405, %v402, 0
      %431 = vmatpush.bf16.xpose.msra.mxu0 0
      %432 = vmatpush.bf16.xpose.msra.mxu0 0
      %433 = vmatpush.bf16.xpose.msra.mxu0 0
      %434 = vmatpush.bf16.xpose.msra.mxu0 0
      %435 = vmatpush.bf16.xpose.msra.mxu0 0
      %436 = vmatpush.bf16.xpose.msra.mxu0 0
      %437 = vmatpush.bf16.xpose.msra.mxu0 0
      %438 = vmatpush.bf16.xpose.msra.mxu0 %v429
      %439 = vmatmul.bf16.gmra.mxu0 %v426
      %v440 = vpop.f32.mrf.mxu0
      %v441 = vadd.f32 0.0, %v440
      %v442 = vpop.f32.mrf.mxu0
      %443 = vdwg.mxu0
      %v445 = vsel %vm405, %v399, 0
      %v448 = vsel %vm405, %v403, 0
      %450 = vmatpush.bf16.xpose.msra.mxu0 0
      %451 = vmatpush.bf16.xpose.msra.mxu0 0
      %452 = vmatpush.bf16.xpose.msra.mxu0 0
      %453 = vmatpush.bf16.xpose.msra.mxu0 0
      %454 = vmatpush.bf16.xpose.msra.mxu0 0
      %455 = vmatpush.bf16.xpose.msra.mxu0 0
      %456 = vmatpush.bf16.xpose.msra.mxu0 0
      %457 = vmatpush.bf16.xpose.msra.mxu0 %v448
      %458 = vmatmul.bf16.gmra.mxu0 %v445
      %v459 = vpop.f32.mrf.mxu0
      %v460 = vadd.f32 0.0, %v459
      %v461 = vpop.f32.mrf.mxu0
      %462 = vdwg.mxu0
      %v464 = vsel %vm405, %v400, 0
      %v467 = vsel %vm405, %v404, 0
      %469 = vmatpush.bf16.xpose.msra.mxu0 0
      %470 = vmatpush.bf16.xpose.msra.mxu0 0
      %471 = vmatpush.bf16.xpose.msra.mxu0 0
      %472 = vmatpush.bf16.xpose.msra.mxu0 0
      %473 = vmatpush.bf16.xpose.msra.mxu0 0
      %474 = vmatpush.bf16.xpose.msra.mxu0 0
      %475 = vmatpush.bf16.xpose.msra.mxu0 0
      %476 = vmatpush.bf16.xpose.msra.mxu0 %v467
      %477 = vmatmul.bf16.gmra.mxu0 %v464
      %v478 = vpop.f32.mrf.mxu0
      %v479 = vadd.f32 0.0, %v478
      %v480 = vpop.f32.mrf.mxu0
      %481 = vdwg.mxu0
      %v482 = vmul.f32 %v422, 0.35355338
      %v483 = vmul.f32 %v441, 0.35355338
      %v484 = vmul.f32 %v460, 0.35355338
      %v485 = vmul.f32 %v479, 0.35355338
      %v486 = vld [vmem:[%s363] sm:$0xff]
      %v487 = vadd.f32 %v482, %v486
      %v488 = vadd.f32 %v483, %v486
      %v489 = vadd.f32 %v484, %v486
      %v490 = vadd.f32 %v485, %v486
      %v491 = vld [vmem:[%s369] sm:$0x1]
      %v493 = vperm.slane %v491, 0
      %v495 = vadd.f32 %v487, %v493
      %v496 = vadd.f32 %v488, %v493
      %v497 = vadd.f32 %v489, %v493
      %v498 = vadd.f32 %v490, %v493
      %v499 = vld [vmem:[#allocation2] sm:$0xff]
      %v500 = vld [vmem:[#allocation2 + $0x8] sm:$0xff]
      %v501 = vld [vmem:[#allocation2 + $0x10] sm:$0xff]
      %v502 = vld [vmem:[#allocation2 + $0x18] sm:$0xff]
      %v503 = vsel %vm405, %v495, -inf
      %504 = vmax.xlane.f32.xlu0 %v503
      %v505 = vpop.xlane.xlu0 %504
      %v506 = vsel %vm405, %v496, -inf
      %507 = vmax.xlane.f32.xlu0 %v506
      %v508 = vpop.xlane.xlu0 %507
      %v509 = vsel %vm405, %v497, -inf
      %510 = vmax.xlane.f32.xlu0 %v509
      %v511 = vpop.xlane.xlu0 %510
      %v512 = vsel %vm405, %v498, -inf
      %513 = vmax.xlane.f32.xlu0 %v512
      %v514 = vpop.xlane.xlu0 %513
      %v515 = vmax.f32 %v499, %v505
      %v516 = vmax.f32 %v500, %v508
      %v517 = vmax.f32 %v501, %v511
      %v518 = vmax.f32 %v502, %v514
      %v519 = vsub.f32 %v499, %v515
      %v520 = vsub.f32 %v500, %v516
      %v521 = vsub.f32 %v501, %v517
      %v522 = vsub.f32 %v502, %v518
      %v523 = vmul.f32 %v519, 1.442695
      %v524 = vpow.pop %v523
      %v525 = vmul.f32 %v520, 1.442695
      %v526 = vpow.pop %v525
      %v527 = vmul.f32 %v521, 1.442695
      %v528 = vpow.pop %v527
      %v529 = vmul.f32 %v522, 1.442695
      %v530 = vpow.pop %v529
      %532 = vset.pattern.permute.xlu0 0
      %533 = vperm.xlu0 %532, %v515
      %v534 = vpop.permute.xlu0 %533
      %537 = vset.pattern.permute.xlu0 0
      %538 = vperm.xlu0 %537, %v516
      %v539 = vpop.permute.xlu0 %538
      %542 = vset.pattern.permute.xlu0 0
      %543 = vperm.xlu0 %542, %v517
      %v544 = vpop.permute.xlu0 %543
      %547 = vset.pattern.permute.xlu0 0
      %548 = vperm.xlu0 %547, %v518
      %v549 = vpop.permute.xlu0 %548
      %v551 = vsub.f32 %v495, %v534
      %v552 = vsub.f32 %v496, %v539
      %v553 = vsub.f32 %v497, %v544
      %v554 = vsub.f32 %v498, %v549
      %v555 = vmul.f32 %v551, 1.442695
      %v556 = vpow.pop %v555
      %v557 = vmul.f32 %v552, 1.442695
      %v558 = vpow.pop %v557
      %v559 = vmul.f32 %v553, 1.442695
      %v560 = vpow.pop %v559
      %v561 = vmul.f32 %v554, 1.442695
      %v562 = vpow.pop %v561
      %v563 = vld [vmem:[#allocation3] sm:$0xff]
      %v564 = vld [vmem:[#allocation3 + $0x8] sm:$0xff]
      %v565 = vld [vmem:[#allocation3 + $0x10] sm:$0xff]
      %v566 = vld [vmem:[#allocation3 + $0x18] sm:$0xff]
      %v567 = vmul.f32 %v524, %v563
      %v568 = vmul.f32 %v526, %v564
      %v569 = vmul.f32 %v528, %v565
      %v570 = vmul.f32 %v530, %v566
      %v571 = vsel %vm405, %v556, 0.0
      %572 = vadd.xlane.f32.xlu0 %v571
      %v573 = vpop.xlane.xlu0 %572
      %v574 = vsel %vm405, %v558, 0.0
      %575 = vadd.xlane.f32.xlu0 %v574
      %v576 = vpop.xlane.xlu0 %575
      %v577 = vsel %vm405, %v560, 0.0
      %578 = vadd.xlane.f32.xlu0 %v577
      %v579 = vpop.xlane.xlu0 %578
      %v580 = vsel %vm405, %v562, 0.0
      %581 = vadd.xlane.f32.xlu0 %v580
      %v582 = vpop.xlane.xlu0 %581
      %v583 = vadd.f32 %v567, %v573
      %v584 = vadd.f32 %v568, %v576
      %v585 = vadd.f32 %v569, %v579
      %v586 = vadd.f32 %v570, %v582
      %vm587 = vcmask 7168
      %588 = vst.msk [vmem:[#allocation3] sm:$0xff] %vm587, %v583
      %589 = vst.msk [vmem:[#allocation3 + $0x8] sm:$0xff] %vm587, %v584
      %590 = vst.msk [vmem:[#allocation3 + $0x10] sm:$0xff] %vm587, %v585
      %591 = vst.msk [vmem:[#allocation3 + $0x18] sm:$0xff] %vm587, %v586
      %v592 = vld [vmem:[#allocation4] sm:$0xff]
      %v593 = vld [vmem:[#allocation4 + $0x8] sm:$0xff]
      %v594 = vld [vmem:[#allocation4 + $0x10] sm:$0xff]
      %v595 = vld [vmem:[#allocation4 + $0x18] sm:$0xff]
      %597 = vset.pattern.permute.xlu0 0
      %598 = vperm.xlu0 %597, %v524
      %v599 = vpop.permute.xlu0 %598
      %602 = vset.pattern.permute.xlu0 0
      %603 = vperm.xlu0 %602, %v526
      %v604 = vpop.permute.xlu0 %603
      %607 = vset.pattern.permute.xlu0 0
      %608 = vperm.xlu0 %607, %v528
      %v609 = vpop.permute.xlu0 %608
      %612 = vset.pattern.permute.xlu0 0
      %613 = vperm.xlu0 %612, %v530
      %v614 = vpop.permute.xlu0 %613
      %v616 = vmul.f32 %v599, %v592
      %v617 = vmul.f32 %v604, %v593
      %v618 = vmul.f32 %v609, %v594
      %v619 = vmul.f32 %v614, %v595
      %v620 = vpack.c.bf16 %v556, %v556
      %v621 = vpack.c.bf16 %v558, %v558
      %v622 = vpack.c.bf16 %v560, %v560
      %v623 = vpack.c.bf16 %v562, %v562
      %v624 = vld [vmem:[%s356] sm:$0xf]
      %v625 = vld [vmem:[%s356 + $0x4] sm:$0xf]
      %v626 = vld [vmem:[%s356 + $0x8] sm:$0xf]
      %v627 = vld [vmem:[%s356 + $0xc] sm:$0xf]
      %v629 = vsel %vm405, %v620, 0
      %vm631 = vcmask 1043456
      %v633 = vsel %vm631, %v624, 0
      %635 = vmatpush.bf16.msra.mxu0 0
      %636 = vmatpush.bf16.msra.mxu0 0
      %637 = vmatpush.bf16.msra.mxu0 0
      %638 = vmatpush.bf16.msra.mxu0 0
      %639 = vmatpush.bf16.msra.mxu0 0
      %640 = vmatpush.bf16.msra.mxu0 0
      %641 = vmatpush.bf16.msra.mxu0 0
      %642 = vmatpush.bf16.msra.mxu0 %v633
      %643 = vmatmul.bf16.gmra.mxu0 %v629
      %v644 = vpop.f32.mrf.mxu0
      %v645 = vadd.f32 0.0, %v644
      %v646 = vpop.f32.mrf.mxu0
      %647 = vdwg.mxu0
      %v649 = vsel %vm405, %v621, 0
      %v652 = vsel %vm631, %v625, 0
      %654 = vmatpush.bf16.msra.mxu0 0
      %655 = vmatpush.bf16.msra.mxu0 0
      %656 = vmatpush.bf16.msra.mxu0 0
      %657 = vmatpush.bf16.msra.mxu0 0
      %658 = vmatpush.bf16.msra.mxu0 0
      %659 = vmatpush.bf16.msra.mxu0 0
      %660 = vmatpush.bf16.msra.mxu0 0
      %661 = vmatpush.bf16.msra.mxu0 %v652
      %662 = vmatmul.bf16.gmra.mxu0 %v649
      %v663 = vpop.f32.mrf.mxu0
      %v664 = vadd.f32 0.0, %v663
      %v665 = vpop.f32.mrf.mxu0
      %666 = vdwg.mxu0
      %v668 = vsel %vm405, %v622, 0
      %v671 = vsel %vm631, %v626, 0
      %673 = vmatpush.bf16.msra.mxu0 0
      %674 = vmatpush.bf16.msra.mxu0 0
      %675 = vmatpush.bf16.msra.mxu0 0
      %676 = vmatpush.bf16.msra.mxu0 0
      %677 = vmatpush.bf16.msra.mxu0 0
      %678 = vmatpush.bf16.msra.mxu0 0
      %679 = vmatpush.bf16.msra.mxu0 0
      %680 = vmatpush.bf16.msra.mxu0 %v671
      %681 = vmatmul.bf16.gmra.mxu0 %v668
      %v682 = vpop.f32.mrf.mxu0
      %v683 = vadd.f32 0.0, %v682
      %v684 = vpop.f32.mrf.mxu0
      %685 = vdwg.mxu0
      %v687 = vsel %vm405, %v623, 0
      %v690 = vsel %vm631, %v627, 0
      %692 = vmatpush.bf16.msra.mxu0 0
      %693 = vmatpush.bf16.msra.mxu0 0
      %694 = vmatpush.bf16.msra.mxu0 0
      %695 = vmatpush.bf16.msra.mxu0 0
      %696 = vmatpush.bf16.msra.mxu0 0
      %697 = vmatpush.bf16.msra.mxu0 0
      %698 = vmatpush.bf16.msra.mxu0 0
      %699 = vmatpush.bf16.msra.mxu0 %v690
      %700 = vmatmul.bf16.gmra.mxu0 %v687
      %v701 = vpop.f32.mrf.mxu0
      %v702 = vadd.f32 0.0, %v701
      %v703 = vpop.f32.mrf.mxu0
      %704 = vdwg.mxu0
      %v705 = vadd.f32 %v616, %v645
      %v706 = vadd.f32 %v617, %v664
      %v707 = vadd.f32 %v618, %v683
      %v708 = vadd.f32 %v619, %v702
      %709 = vst.msk [vmem:[#allocation4] sm:$0xff] %vm405, %v705
      %710 = vst.msk [vmem:[#allocation4 + $0x8] sm:$0xff] %vm405, %v706
      %711 = vst.msk [vmem:[#allocation4 + $0x10] sm:$0xff] %vm405, %v707
      %712 = vst.msk [vmem:[#allocation4 + $0x18] sm:$0xff] %vm405, %v708
      %713 = vst.msk [vmem:[#allocation2] sm:$0xff] %vm587, %v515
      %714 = vst.msk [vmem:[#allocation2 + $0x8] sm:$0xff] %vm587, %v516
      %715 = vst.msk [vmem:[#allocation2 + $0x10] sm:$0xff] %vm587, %v517
      %716 = vst.msk [vmem:[#allocation2 + $0x18] sm:$0xff] %vm587, %v518
      // Predicated region
      $region45: #{seq2seq_transformer_forward.37} parent=39 // pred_check
        %p717 = pneg %p379
      $region46: #{seq2seq_transformer_forward.37} parent=39 // pred_check_branch
        %719 = sbr.rel (%p717) target = $region48
      $region47: #{seq2seq_transformer_forward.37} parent=39 // pred_region
        %v720 = vld [vmem:[#allocation3] sm:$0xff]
        %v721 = vld [vmem:[#allocation3 + $0x8] sm:$0xff]
        %v722 = vld [vmem:[#allocation3 + $0x10] sm:$0xff]
        %v723 = vld [vmem:[#allocation3 + $0x18] sm:$0xff]
        %v724 = vrcp.pop %v720
        %v725 = vrcp.pop %v721
        %v726 = vrcp.pop %v722
        %v727 = vrcp.pop %v723
        %v728 = vld [vmem:[#allocation4] sm:$0xff]
        %v729 = vld [vmem:[#allocation4 + $0x8] sm:$0xff]
        %v730 = vld [vmem:[#allocation4 + $0x10] sm:$0xff]
        %v731 = vld [vmem:[#allocation4 + $0x18] sm:$0xff]
        %733 = vset.pattern.permute.xlu0 0
        %734 = vperm.xlu0 %733, %v724
        %v735 = vpop.permute.xlu0 %734
        %738 = vset.pattern.permute.xlu0 0
        %739 = vperm.xlu0 %738, %v725
        %v740 = vpop.permute.xlu0 %739
        %743 = vset.pattern.permute.xlu0 0
        %744 = vperm.xlu0 %743, %v726
        %v745 = vpop.permute.xlu0 %744
        %748 = vset.pattern.permute.xlu0 0
        %749 = vperm.xlu0 %748, %v727
        %v750 = vpop.permute.xlu0 %749
        %v752 = vmul.f32 %v728, %v735
        %v753 = vmul.f32 %v729, %v740
        %v754 = vmul.f32 %v730, %v745
        %v755 = vmul.f32 %v731, %v750
        %v756 = vpack.c.bf16 %v752, %v752
        %v757 = vpack.c.bf16 %v753, %v753
        %v758 = vpack.c.bf16 %v754, %v754
        %v759 = vpack.c.bf16 %v755, %v755
        %vm760 = vcmask 60416
        %761 = vst.msk [vmem:[%s377] sm:$0xf] %vm760, %v756
        %762 = vst.msk [vmem:[%s377 + $0x4] sm:$0xf] %vm760, %v757
        %763 = vst.msk [vmem:[%s377 + $0x8] sm:$0xf] %vm760, %v758
        %764 = vst.msk [vmem:[%s377 + $0xc] sm:$0xf] %vm760, %v759
      $region48: #{seq2seq_transformer_forward.37} parent=39 // pred_fallthru
        _
      %p765 = scmp.lt.s32.totalorder %s21, 1
      %s766 = scalar_select %p765, %s21, 1
      %p767 = scmp.lt.s32.totalorder %s22, 0
      %s768 = scalar_select %p767, %s22, 0
      %s769 = smul.addr %s766, 4
      %s770 = sadd.s32 %s768, %s769
      %s771 = smul.addr %s770, 4
      %s772 = scalar_lea.vmem %s5, %s771
      // Predicated region
      $region49: #{seq2seq_transformer_forward.37} parent=39 // pred_check
        %p773 = pneg %p195
      $region50: #{seq2seq_transformer_forward.37} parent=39 // pred_check_branch
        %775 = sbr.rel (%p773) target = $region52
      $region51: #{seq2seq_transformer_forward.37} parent=39 // pred_region
        _
      $region52: #{seq2seq_transformer_forward.37} parent=39 // pred_fallthru
        _
    $region40: #{seq2seq_transformer_forward.37} parent=5 // pred_fallthru
      _
    %p776 = scmp.le.s32.totalorder 2, %s11
    // Predicated region
    $region53: #{seq2seq_transformer_forward.37} parent=5 // pred_check
      %p777 = pneg %p776
    $region54: #{seq2seq_transformer_forward.37} parent=5 // pred_check_branch
      %779 = sbr.rel (%p777) target = $region56
    $region55: #{seq2seq_transformer_forward.37} parent=5 // pred_region
      %s780 = ssub.s32 %s11, 2
      // Predicated region
      $region57: #{seq2seq_transformer_forward.37} parent=55 // pred_check
        %p781 = pneg %p201
      $region58: #{seq2seq_transformer_forward.37} parent=55 // pred_check_branch
        %783 = sbr.rel (%p781) target = $region60
      $region59: #{seq2seq_transformer_forward.37} parent=55 // pred_region
        %p784 = scmp.lt.s32.totalorder %s24, 1
        %s785 = scalar_select %p784, %s24, 1
        %p786 = scmp.lt.s32.totalorder %s25, 0
        %s787 = scalar_select %p786, %s25, 0
        %s788 = smul.addr %s785, 4
        %s789 = sadd.s32 %s787, %s788
        %s790 = smul.addr %s789, 4
        %s791 = scalar_lea.vmem %s5, %s790
      $region60: #{seq2seq_transformer_forward.37} parent=55 // pred_fallthru
        _
    $region56: #{seq2seq_transformer_forward.37} parent=5 // pred_fallthru
      _
  $region6: #{seq2seq_transformer_forward.37} parent=0 // loop_footer
    %s15 = sadd.s32 1, %s11
  $region7: #{seq2seq_transformer_forward.37} parent=0 // loop_footer_branch
    %10 = sbr.rel target = $region3
  $region8: #{seq2seq_transformer_forward.37} parent=0 // loop_exit
    _

// kernel: seq2seq_transformer_forward.40
$region0: #{seq2seq_transformer_forward.40}
  #allocation0 [shape = 'u32[]', space=smem, size = 0x4, offset = 0x4, fixed_abs, tag = 'smem constant byte address 0x4 - core index']
  #allocation1 [shape = 'u32[72,128]{1,0:T(1,128)}', space=vmem, size = 0x9000, scoped, tag = 'internal scratch']
  %s0 = inlined_call_operand.vmem [shape: bf16[16,32], index: 0, kind: input, shape index: {}]
  %s1 = inlined_call_operand.vmem [shape: bf16[32,64], index: 1, kind: input, shape index: {}]
  %s2 = inlined_call_operand.vmem [shape: f32[1,64], index: 2, kind: input, shape index: {}]
  %s3 = inlined_call_operand.vmem [shape: bf16[16,64], index: 3, kind: output, shape index: {}]
  %s4 = sld [smem:[#allocation0]]
  $region22: #{seq2seq_transformer_forward.40} parent=0
    _
  %s6 = ssub.s32 1, %s4
  %s7 = scalar_select 0, %s6, %s4
  // Predicated region
  $region2: #{seq2seq_transformer_forward.40} parent=0 // pred_check
    _
  $region3: #{seq2seq_transformer_forward.40} parent=0 // pred_check_branch
    %9 = sbr.rel (0) target = $region5
  $region4: #{seq2seq_transformer_forward.40} parent=0 // pred_region
    _
  $region5: #{seq2seq_transformer_forward.40} parent=0 // pred_fallthru
    _
  // Predicated region
  $region6: #{seq2seq_transformer_forward.40} parent=0 // pred_check
    _
  $region7: #{seq2seq_transformer_forward.40} parent=0 // pred_check_branch
    %11 = sbr.rel (0) target = $region9
  $region8: #{seq2seq_transformer_forward.40} parent=0 // pred_region
    _
  $region9: #{seq2seq_transformer_forward.40} parent=0 // pred_fallthru
    _
  // Predicated region
  $region10: #{seq2seq_transformer_forward.40} parent=0 // pred_check
    _
  $region11: #{seq2seq_transformer_forward.40} parent=0 // pred_check_branch
    %13 = sbr.rel (0) target = $region13
  $region12: #{seq2seq_transformer_forward.40} parent=0 // pred_region
    _
  $region13: #{seq2seq_transformer_forward.40} parent=0 // pred_fallthru
    _
  %v15 = vld [vmem:[%s0] sm:$0xf]
  %v16 = vld [vmem:[%s0 + $0x4] sm:$0xf]
  %v17 = vld [vmem:[%s1] sm:$0xf]
  %v18 = vld [vmem:[%s1 + $0x4] sm:$0xf]
  %v19 = vld [vmem:[%s1 + $0x8] sm:$0xf]
  %v20 = vld [vmem:[%s1 + $0xc] sm:$0xf]
  %v21 = vld [vmem:[%s2] sm:$0x1]
  %v23 = vperm.slane %v21, 0
  %v27 = vunpack.c.l.b16 %v15
  %v28 = vunpack.c.l.b16 %v16
  %v29 = vpack.c.b16 %v28, %v27
  %v34 = vunpack.c.l.b16 %v17
  %v35 = vunpack.c.l.b16 %v18
  %v36 = vunpack.c.l.b16 %v19
  %v37 = vunpack.c.l.b16 %v20
  %v38 = vpack.c.b16 %v35, %v34
  %v39 = vpack.c.b16 %v37, %v36
  %vm42 = vcmask 261120
  %v44 = vsel %vm42, %v29, 0
  %46 = vmatpush.bf16.msra.mxu0 0
  %47 = vmatpush.bf16.msra.mxu0 0
  %48 = vmatpush.bf16.msra.mxu0 0
  %49 = vmatpush.bf16.msra.mxu0 0
  %50 = vmatpush.bf16.msra.mxu0 0
  %51 = vmatpush.bf16.msra.mxu0 0
  %52 = vmatpush.bf16.msra.mxu0 %v39
  %53 = vmatpush.bf16.msra.mxu0 %v38
  %54 = vmatmul.bf16.gmra.mxu0 %v44
  %v55 = vpop.f32.mrf.mxu0
  %v56 = vadd.f32 %v23, %v55
  %v57 = vpop.f32.mrf.mxu0
  %v58 = vadd.f32 %v23, %v57
  %59 = vdwg.mxu0
  %v60 = vpack.c.bf16 %v56, %v56
  %v61 = vpack.c.bf16 %v58, %v58
  %vm62 = vcmask 519168
  %63 = vst.msk [vmem:[%s3] sm:$0xf] %vm62, %v60
  %64 = vst.msk [vmem:[%s3 + $0x4] sm:$0xf] %vm62, %v61
  // Predicated region
  $region14: #{seq2seq_transformer_forward.40} parent=0 // pred_check
    _
  $region15: #{seq2seq_transformer_forward.40} parent=0 // pred_check_branch
    %66 = sbr.rel (0) target = $region17
  $region16: #{seq2seq_transformer_forward.40} parent=0 // pred_region
    _
  $region17: #{seq2seq_transformer_forward.40} parent=0 // pred_fallthru
    _
  // Predicated region
  $region18: #{seq2seq_transformer_forward.40} parent=0 // pred_check
    _
  $region19: #{seq2seq_transformer_forward.40} parent=0 // pred_check_branch
    %68 = sbr.rel (0) target = $region21
  $region20: #{seq2seq_transformer_forward.40} parent=0 // pred_region
    _
  $region21: #{seq2seq_transformer_forward.40} parent=0 // pred_fallthru
    _

// kernel: seq2seq_transformer_forward.35
$region0: #{seq2seq_transformer_forward.35}
  #allocation0 [shape = 'u32[]', space=smem, size = 0x4, offset = 0x4, fixed_abs, tag = 'smem constant byte address 0x4 - core index']
  #allocation1 [shape = 'u32[72,128]{1,0:T(1,128)}', space=vmem, size = 0x9000, scoped, tag = 'internal scratch']
  %s0 = inlined_call_operand.vmem [shape: bf16[16,32], index: 0, kind: input, shape index: {}]
  %s1 = inlined_call_operand.vmem [shape: f32[1,32], index: 1, kind: input, shape index: {}]
  %s2 = inlined_call_operand.vmem [shape: f32[1,32], index: 2, kind: input, shape index: {}]
  %s3 = inlined_call_operand.vmem [shape: bf16[16,32], index: 3, kind: output, shape index: {}]
  %s4 = sld [smem:[#allocation0]]
  $region22: #{seq2seq_transformer_forward.35} parent=0
    _
  %s6 = ssub.s32 1, %s4
  %s7 = scalar_select 0, %s6, %s4
  // Predicated region
  $region2: #{seq2seq_transformer_forward.35} parent=0 // pred_check
    _
  $region3: #{seq2seq_transformer_forward.35} parent=0 // pred_check_branch
    %9 = sbr.rel (0) target = $region5
  $region4: #{seq2seq_transformer_forward.35} parent=0 // pred_region
    _
  $region5: #{seq2seq_transformer_forward.35} parent=0 // pred_fallthru
    _
  // Predicated region
  $region6: #{seq2seq_transformer_forward.35} parent=0 // pred_check
    _
  $region7: #{seq2seq_transformer_forward.35} parent=0 // pred_check_branch
    %11 = sbr.rel (0) target = $region9
  $region8: #{seq2seq_transformer_forward.35} parent=0 // pred_region
    _
  $region9: #{seq2seq_transformer_forward.35} parent=0 // pred_fallthru
    _
  // Predicated region
  $region10: #{seq2seq_transformer_forward.35} parent=0 // pred_check
    _
  $region11: #{seq2seq_transformer_forward.35} parent=0 // pred_check_branch
    %13 = sbr.rel (0) target = $region13
  $region12: #{seq2seq_transformer_forward.35} parent=0 // pred_region
    _
  $region13: #{seq2seq_transformer_forward.35} parent=0 // pred_fallthru
    _
  %v14 = vld [vmem:[%s0] sm:$0xf]
  %v15 = vld [vmem:[%s0 + $0x4] sm:$0xf]
  %v16 = vunpack.c.l.bf16 %v14
  %v17 = vunpack.c.l.bf16 %v15
  %v18 = vld [vmem:[%s1] sm:$0x1]
  %v19 = vld [vmem:[%s2] sm:$0x1]
  %vm20 = vcmask 261120
  %v21 = vsel %vm20, %v16, 0.0
  %22 = vadd.xlane.f32.xlu0 %v21
  %v23 = vpop.xlane.xlu0 %22
  %v24 = vsel %vm20, %v17, 0.0
  %25 = vadd.xlane.f32.xlu0 %v24
  %v26 = vpop.xlane.xlu0 %25
  %v27 = vrcp.pop 32.0
  %v28 = vmul.f32 32.0, %v27
  %v29 = vsub.f32 1.0, %v28
  %v30 = vmul.f32 %v27, %v29
  %v31 = vadd.f32 %v27, %v30
  %vm32 = vweird.f32 %v27
  %v33 = vsel %vm32, %v27, %v31
  %v34 = vmul.f32 %v23, %v33
  %v35 = vmul.f32 %v26, %v33
  %v36 = vsub.f32 %v16, %v34
  %v37 = vsub.f32 %v17, %v35
  %v38 = vmul.f32 %v36, %v36
  %v39 = vmul.f32 %v37, %v37
  %v40 = vsel %vm20, %v38, 0.0
  %41 = vadd.xlane.f32.xlu0 %v40
  %v42 = vpop.xlane.xlu0 %41
  %v43 = vsel %vm20, %v39, 0.0
  %44 = vadd.xlane.f32.xlu0 %v43
  %v45 = vpop.xlane.xlu0 %44
  %v46 = vmul.f32 %v42, %v33
  %v47 = vmul.f32 %v45, %v33
  %v48 = vadd.f32 %v46, 1e-05
  %v49 = vadd.f32 %v47, 1e-05
  %v50 = vrsqrt.pop %v48
  %v51 = vmul.f32 %v50, %v48
  %v52 = vmul.f32 %v51, %v50
  %v53 = vmul.f32 0.5, %v52
  %v54 = vsub.f32 1.5, %v53
  %v55 = vmul.f32 %v50, %v54
  %vm56 = vweird.f32 %v48
  %vm57 = vweird.f32 %v50
  %vm58 = vmor %vm56, %vm57
  %v59 = vsel %vm58, %v50, %v55
  %v60 = vrsqrt.pop %v49
  %v61 = vmul.f32 %v60, %v49
  %v62 = vmul.f32 %v61, %v60
  %v63 = vmul.f32 0.5, %v62
  %v64 = vsub.f32 1.5, %v63
  %v65 = vmul.f32 %v60, %v64
  %vm66 = vweird.f32 %v49
  %vm67 = vweird.f32 %v60
  %vm68 = vmor %vm66, %vm67
  %v69 = vsel %vm68, %v60, %v65
  %v70 = vmul.f32 %v36, %v59
  %v71 = vmul.f32 %v37, %v69
  %v73 = vperm.slane %v18, 0
  %v75 = vmul.f32 %v70, %v73
  %v76 = vmul.f32 %v71, %v73
  %v78 = vperm.slane %v19, 0
  %v80 = vadd.f32 %v75, %v78
  %v81 = vadd.f32 %v76, %v78
  %v82 = vpack.c.bf16 %v80, %v80
  %v83 = vpack.c.bf16 %v81, %v81
  %vm84 = vcmask 257024
  %85 = vst.msk [vmem:[%s3] sm:$0xf] %vm84, %v82
  %86 = vst.msk [vmem:[%s3 + $0x4] sm:$0xf] %vm84, %v83
  // Predicated region
  $region14: #{seq2seq_transformer_forward.35} parent=0 // pred_check
    _
  $region15: #{seq2seq_transformer_forward.35} parent=0 // pred_check_branch
    %88 = sbr.rel (0) target = $region17
  $region16: #{seq2seq_transformer_forward.35} parent=0 // pred_region
    _
  $region17: #{seq2seq_transformer_forward.35} parent=0 // pred_fallthru
    _
  // Predicated region
  $region18: #{seq2seq_transformer_forward.35} parent=0 // pred_check
    _
  $region19: #{seq2seq_transformer_forward.35} parent=0 // pred_check_branch
    %90 = sbr.rel (0) target = $region21
  $region20: #{seq2seq_transformer_forward.35} parent=0 // pred_region
    _
  $region21: #{seq2seq_transformer_forward.35} parent=0 // pred_fallthru
    _

// kernel: seq2seq_transformer_forward.30
$region0: #{seq2seq_transformer_forward.30}
  #allocation0 [shape = 'u32[]', space=smem, size = 0x4, offset = 0x4, fixed_abs, tag = 'smem constant byte address 0x4 - core index']
  #allocation1 [shape = 'u32[72,128]{1,0:T(1,128)}', space=vmem, size = 0x9000, scoped, tag = 'internal scratch']
  %s0 = inlined_call_operand.vmem [shape: bf16[16,32], index: 0, kind: input, shape index: {}]
  %s1 = inlined_call_operand.vmem [shape: bf16[32,64], index: 1, kind: input, shape index: {}]
  %s2 = inlined_call_operand.vmem [shape: f32[1,64], index: 2, kind: input, shape index: {}]
  %s3 = inlined_call_operand.vmem [shape: bf16[64,32], index: 3, kind: input, shape index: {}]
  %s4 = inlined_call_operand.vmem [shape: f32[1,32], index: 4, kind: input, shape index: {}]
  %s5 = inlined_call_operand.vmem [shape: f32[1,32], index: 5, kind: input, shape index: {}]
  %s6 = inlined_call_operand.vmem [shape: f32[1,32], index: 6, kind: input, shape index: {}]
  %s7 = inlined_call_operand.vmem [shape: bf16[16,32], index: 7, kind: output, shape index: {}]
  %s8 = sld [smem:[#allocation0]]
  $region38: #{seq2seq_transformer_forward.30} parent=0
    _
  %s10 = ssub.s32 1, %s8
  %s11 = scalar_select 0, %s10, %s8
  // Predicated region
  $region2: #{seq2seq_transformer_forward.30} parent=0 // pred_check
    _
  $region3: #{seq2seq_transformer_forward.30} parent=0 // pred_check_branch
    %13 = sbr.rel (0) target = $region5
  $region4: #{seq2seq_transformer_forward.30} parent=0 // pred_region
    _
  $region5: #{seq2seq_transformer_forward.30} parent=0 // pred_fallthru
    _
  // Predicated region
  $region6: #{seq2seq_transformer_forward.30} parent=0 // pred_check
    _
  $region7: #{seq2seq_transformer_forward.30} parent=0 // pred_check_branch
    %15 = sbr.rel (0) target = $region9
  $region8: #{seq2seq_transformer_forward.30} parent=0 // pred_region
    _
  $region9: #{seq2seq_transformer_forward.30} parent=0 // pred_fallthru
    _
  // Predicated region
  $region10: #{seq2seq_transformer_forward.30} parent=0 // pred_check
    _
  $region11: #{seq2seq_transformer_forward.30} parent=0 // pred_check_branch
    %17 = sbr.rel (0) target = $region13
  $region12: #{seq2seq_transformer_forward.30} parent=0 // pred_region
    _
  $region13: #{seq2seq_transformer_forward.30} parent=0 // pred_fallthru
    _
  // Predicated region
  $region14: #{seq2seq_transformer_forward.30} parent=0 // pred_check
    _
  $region15: #{seq2seq_transformer_forward.30} parent=0 // pred_check_branch
    %19 = sbr.rel (0) target = $region17
  $region16: #{seq2seq_transformer_forward.30} parent=0 // pred_region
    _
  $region17: #{seq2seq_transformer_forward.30} parent=0 // pred_fallthru
    _
  // Predicated region
  $region18: #{seq2seq_transformer_forward.30} parent=0 // pred_check
    _
  $region19: #{seq2seq_transformer_forward.30} parent=0 // pred_check_branch
    %21 = sbr.rel (0) target = $region21
  $region20: #{seq2seq_transformer_forward.30} parent=0 // pred_region
    _
  $region21: #{seq2seq_transformer_forward.30} parent=0 // pred_fallthru
    _
  // Predicated region
  $region22: #{seq2seq_transformer_forward.30} parent=0 // pred_check
    _
  $region23: #{seq2seq_transformer_forward.30} parent=0 // pred_check_branch
    %23 = sbr.rel (0) target = $region25
  $region24: #{seq2seq_transformer_forward.30} parent=0 // pred_region
    _
  $region25: #{seq2seq_transformer_forward.30} parent=0 // pred_fallthru
    _
  // Predicated region
  $region26: #{seq2seq_transformer_forward.30} parent=0 // pred_check
    _
  $region27: #{seq2seq_transformer_forward.30} parent=0 // pred_check_branch
    %25 = sbr.rel (0) target = $region29
  $region28: #{seq2seq_transformer_forward.30} parent=0 // pred_region
    _
  $region29: #{seq2seq_transformer_forward.30} parent=0 // pred_fallthru
    _
  %v27 = vld [vmem:[%s0] sm:$0xf]
  %v28 = vld [vmem:[%s0 + $0x4] sm:$0xf]
  %v29 = vld [vmem:[%s1] sm:$0xf]
  %v30 = vld [vmem:[%s1 + $0x4] sm:$0xf]
  %v31 = vld [vmem:[%s1 + $0x8] sm:$0xf]
  %v32 = vld [vmem:[%s1 + $0xc] sm:$0xf]
  %v33 = vld [vmem:[%s2] sm:$0x1]
  %v35 = vperm.slane %v33, 0
  %v39 = vunpack.c.l.b16 %v27
  %v40 = vunpack.c.l.b16 %v28
  %v41 = vpack.c.b16 %v40, %v39
  %v46 = vunpack.c.l.b16 %v29
  %v47 = vunpack.c.l.b16 %v30
  %v48 = vunpack.c.l.b16 %v31
  %v49 = vunpack.c.l.b16 %v32
  %v50 = vpack.c.b16 %v47, %v46
  %v51 = vpack.c.b16 %v49, %v48
  %vm54 = vcmask 261120
  %v56 = vsel %vm54, %v41, 0
  %58 = vmatpush.bf16.msra.mxu0 0
  %59 = vmatpush.bf16.msra.mxu0 0
  %60 = vmatpush.bf16.msra.mxu0 0
  %61 = vmatpush.bf16.msra.mxu0 0
  %62 = vmatpush.bf16.msra.mxu0 0
  %63 = vmatpush.bf16.msra.mxu0 0
  %64 = vmatpush.bf16.msra.mxu0 %v51
  %65 = vmatpush.bf16.msra.mxu0 %v50
  %66 = vmatmul.bf16.gmra.mxu0 %v56
  %v67 = vpop.f32.mrf.mxu0
  %v68 = vadd.f32 %v35, %v67
  %v69 = vpop.f32.mrf.mxu0
  %v70 = vadd.f32 %v35, %v69
  %71 = vdwg.mxu0
  %v72 = vmax.f32 %v68, 0.0
  %v73 = vmax.f32 %v70, 0.0
  %v74 = vpack.c.bf16 %v73, %v72
  %v75 = vld [vmem:[%s3] sm:$0xf]
  %v76 = vld [vmem:[%s3 + $0x4] sm:$0xf]
  %v77 = vld [vmem:[%s3 + $0x8] sm:$0xf]
  %v78 = vld [vmem:[%s3 + $0xc] sm:$0xf]
  %v79 = vld [vmem:[%s3 + $0x10] sm:$0xf]
  %v80 = vld [vmem:[%s3 + $0x14] sm:$0xf]
  %v81 = vld [vmem:[%s3 + $0x18] sm:$0xf]
  %v82 = vld [vmem:[%s3 + $0x1c] sm:$0xf]
  %v83 = vld [vmem:[%s4] sm:$0x1]
  %v85 = vperm.slane %v83, 0
  %v95 = vunpack.c.l.b16 %v75
  %v96 = vunpack.c.l.b16 %v76
  %v97 = vunpack.c.l.b16 %v77
  %v98 = vunpack.c.l.b16 %v78
  %v99 = vunpack.c.l.b16 %v79
  %v100 = vunpack.c.l.b16 %v80
  %v101 = vunpack.c.l.b16 %v81
  %v102 = vunpack.c.l.b16 %v82
  %v103 = vpack.c.b16 %v96, %v95
  %v104 = vpack.c.b16 %v98, %v97
  %v105 = vpack.c.b16 %v100, %v99
  %v106 = vpack.c.b16 %v102, %v101
  %vm111 = vcmask 523264
  %v113 = vsel %vm111, %v74, 0
  %115 = vmatpush.bf16.msra.mxu0 0
  %116 = vmatpush.bf16.msra.mxu0 0
  %117 = vmatpush.bf16.msra.mxu0 0
  %118 = vmatpush.bf16.msra.mxu0 0
  %119 = vmatpush.bf16.msra.mxu0 %v106
  %120 = vmatpush.bf16.msra.mxu0 %v105
  %121 = vmatpush.bf16.msra.mxu0 %v104
  %122 = vmatpush.bf16.msra.mxu0 %v103
  %123 = vmatmul.bf16.gmra.mxu0 %v113
  %v124 = vpop.f32.mrf.mxu0
  %v125 = vadd.f32 %v85, %v124
  %v126 = vpop.f32.mrf.mxu0
  %v127 = vadd.f32 %v85, %v126
  %128 = vdwg.mxu0
  %v129 = vunpack.c.l.bf16 %v27
  %v130 = vunpack.c.l.bf16 %v28
  %v131 = vadd.f32 %v125, %v129
  %v132 = vadd.f32 %v127, %v130
  %v133 = vld [vmem:[%s5] sm:$0x1]
  %v134 = vld [vmem:[%s6] sm:$0x1]
  %v135 = vsel %vm54, %v131, 0.0
  %136 = vadd.xlane.f32.xlu0 %v135
  %v137 = vpop.xlane.xlu0 %136
  %v138 = vsel %vm54, %v132, 0.0
  %139 = vadd.xlane.f32.xlu0 %v138
  %v140 = vpop.xlane.xlu0 %139
  %v141 = vrcp.pop 32.0
  %v142 = vmul.f32 32.0, %v141
  %v143 = vsub.f32 1.0, %v142
  %v144 = vmul.f32 %v141, %v143
  %v145 = vadd.f32 %v141, %v144
  %vm146 = vweird.f32 %v141
  %v147 = vsel %vm146, %v141, %v145
  %v148 = vmul.f32 %v137, %v147
  %v149 = vmul.f32 %v140, %v147
  %v150 = vsub.f32 %v131, %v148
  %v151 = vsub.f32 %v132, %v149
  %v152 = vmul.f32 %v150, %v150
  %v153 = vmul.f32 %v151, %v151
  %v154 = vsel %vm54, %v152, 0.0
  %155 = vadd.xlane.f32.xlu0 %v154
  %v156 = vpop.xlane.xlu0 %155
  %v157 = vsel %vm54, %v153, 0.0
  %158 = vadd.xlane.f32.xlu0 %v157
  %v159 = vpop.xlane.xlu0 %158
  %v160 = vmul.f32 %v156, %v147
  %v161 = vmul.f32 %v159, %v147
  %v162 = vadd.f32 %v160, 1e-05
  %v163 = vadd.f32 %v161, 1e-05
  %v164 = vrsqrt.pop %v162
  %v165 = vmul.f32 %v164, %v162
  %v166 = vmul.f32 %v165, %v164
  %v167 = vmul.f32 0.5, %v166
  %v168 = vsub.f32 1.5, %v167
  %v169 = vmul.f32 %v164, %v168
  %vm170 = vweird.f32 %v162
  %vm171 = vweird.f32 %v164
  %vm172 = vmor %vm170, %vm171
  %v173 = vsel %vm172, %v164, %v169
  %v174 = vrsqrt.pop %v163
  %v175 = vmul.f32 %v174, %v163
  %v176 = vmul.f32 %v175, %v174
  %v177 = vmul.f32 0.5, %v176
  %v178 = vsub.f32 1.5, %v177
  %v179 = vmul.f32 %v174, %v178
  %vm180 = vweird.f32 %v163
  %vm181 = vweird.f32 %v174
  %vm182 = vmor %vm180, %vm181
  %v183 = vsel %vm182, %v174, %v179
  %v184 = vmul.f32 %v150, %v173
  %v185 = vmul.f32 %v151, %v183
  %v187 = vperm.slane %v133, 0
  %v189 = vmul.f32 %v184, %v187
  %v190 = vmul.f32 %v185, %v187
  %v192 = vperm.slane %v134, 0
  %v194 = vadd.f32 %v189, %v192
  %v195 = vadd.f32 %v190, %v192
  %v196 = vpack.c.bf16 %v194, %v194
  %v197 = vpack.c.bf16 %v195, %v195
  %vm198 = vcmask 257024
  %199 = vst.msk [vmem:[%s7] sm:$0xf] %vm198, %v196
  %200 = vst.msk [vmem:[%s7 + $0x4] sm:$0xf] %vm198, %v197
  // Predicated region
  $region30: #{seq2seq_transformer_forward.30} parent=0 // pred_check
    _
  $region31: #{seq2seq_transformer_forward.30} parent=0 // pred_check_branch
    %202 = sbr.rel (0) target = $region33
  $region32: #{seq2seq_transformer_forward.30} parent=0 // pred_region
    _
  $region33: #{seq2seq_transformer_forward.30} parent=0 // pred_fallthru
    _
  // Predicated region
  $region34: #{seq2seq_transformer_forward.30} parent=0 // pred_check
    _
  $region35: #{seq2seq_transformer_forward.30} parent=0 // pred_check_branch
    %204 = sbr.rel (0) target = $region37
  $region36: #{seq2seq_transformer_forward.30} parent=0 // pred_region
    _
  $region37: #{seq2seq_transformer_forward.30} parent=0 // pred_fallthru
    _

// kernel: seq2seq_transformer_forward.53
$region0: #{seq2seq_transformer_forward.53}
  #allocation0 [shape = 'u32[]', space=smem, size = 0x4, offset = 0x4, fixed_abs, tag = 'smem constant byte address 0x4 - core index']
  #allocation1 [shape = 'u32[72,128]{1,0:T(1,128)}', space=vmem, size = 0x9000, scoped, tag = 'internal scratch']
  %s0 = inlined_call_operand.vmem [shape: bf16[16,32], index: 0, kind: input, shape index: {}]
  %s1 = inlined_call_operand.vmem [shape: bf16[32,64], index: 1, kind: input, shape index: {}]
  %s2 = inlined_call_operand.vmem [shape: f32[1,64], index: 2, kind: input, shape index: {}]
  %s3 = inlined_call_operand.hbm [shape: f32[16,64], index: 3, kind: output, shape index: {}]
  %s4 = sld [smem:[#allocation0]]
  $region22: #{seq2seq_transformer_forward.53} parent=0
    _
  %s6 = ssub.s32 1, %s4
  %s7 = scalar_select 0, %s6, %s4
  $region1: #{seq2seq_transformer_forward.53} parent=0
    #allocation2 [shape = 'u8[8192]{0}', space=vmem, size = 0x2000, scoped, tag = 'output window, operand 0, single buffered']
    #allocation3 [shape = 's32[1]{0}', space=sflag, size = 0x4, scoped, tag = 'scoped memory for seq2seq_transformer_forward.53']
    %8 = vsyncpa [#allocation3], 0
    // Predicated region
    $region2: #{seq2seq_transformer_forward.53} parent=1 // pred_check
      _
    $region3: #{seq2seq_transformer_forward.53} parent=1 // pred_check_branch
      %10 = sbr.rel (0) target = $region5
    $region4: #{seq2seq_transformer_forward.53} parent=1 // pred_region
      _
    $region5: #{seq2seq_transformer_forward.53} parent=1 // pred_fallthru
      _
    // Predicated region
    $region6: #{seq2seq_transformer_forward.53} parent=1 // pred_check
      _
    $region7: #{seq2seq_transformer_forward.53} parent=1 // pred_check_branch
      %12 = sbr.rel (0) target = $region9
    $region8: #{seq2seq_transformer_forward.53} parent=1 // pred_region
      _
    $region9: #{seq2seq_transformer_forward.53} parent=1 // pred_fallthru
      _
    // Predicated region
    $region10: #{seq2seq_transformer_forward.53} parent=1 // pred_check
      _
    $region11: #{seq2seq_transformer_forward.53} parent=1 // pred_check_branch
      %14 = sbr.rel (0) target = $region13
    $region12: #{seq2seq_transformer_forward.53} parent=1 // pred_region
      _
    $region13: #{seq2seq_transformer_forward.53} parent=1 // pred_fallthru
      _
    %v16 = vld [vmem:[%s0] sm:$0xf]
    %v17 = vld [vmem:[%s0 + $0x4] sm:$0xf]
    %v18 = vld [vmem:[%s1] sm:$0xf]
    %v19 = vld [vmem:[%s1 + $0x4] sm:$0xf]
    %v20 = vld [vmem:[%s1 + $0x8] sm:$0xf]
    %v21 = vld [vmem:[%s1 + $0xc] sm:$0xf]
    %v22 = vld [vmem:[%s2] sm:$0x1]
    %v24 = vperm.slane %v22, 0
    %v28 = vunpack.c.l.b16 %v16
    %v29 = vunpack.c.l.b16 %v17
    %v30 = vpack.c.b16 %v29, %v28
    %v35 = vunpack.c.l.b16 %v18
    %v36 = vunpack.c.l.b16 %v19
    %v37 = vunpack.c.l.b16 %v20
    %v38 = vunpack.c.l.b16 %v21
    %v39 = vpack.c.b16 %v36, %v35
    %v40 = vpack.c.b16 %v38, %v37
    %vm43 = vcmask 261120
    %v45 = vsel %vm43, %v30, 0
    %47 = vmatpush.bf16.msra.mxu0 0
    %48 = vmatpush.bf16.msra.mxu0 0
    %49 = vmatpush.bf16.msra.mxu0 0
    %50 = vmatpush.bf16.msra.mxu0 0
    %51 = vmatpush.bf16.msra.mxu0 0
    %52 = vmatpush.bf16.msra.mxu0 0
    %53 = vmatpush.bf16.msra.mxu0 %v40
    %54 = vmatpush.bf16.msra.mxu0 %v39
    %55 = vmatmul.bf16.gmra.mxu0 %v45
    %v56 = vpop.f32.mrf.mxu0
    %v57 = vadd.f32 %v24, %v56
    %v58 = vpop.f32.mrf.mxu0
    %v59 = vadd.f32 %v24, %v58
    %60 = vdwg.mxu0
    %vm61 = vcmask 523264
    %62 = vst.msk [vmem:[#allocation2] sm:$0xff] %vm61, %v57
    %63 = vst.msk [vmem:[#allocation2 + $0x8] sm:$0xff] %vm61, %v59
    // Predicated region
    $region14: #{seq2seq_transformer_forward.53} parent=1 // pred_check
      _
    $region15: #{seq2seq_transformer_forward.53} parent=1 // pred_check_branch
      %65 = sbr.rel (0) target = $region17
    $region16: #{seq2seq_transformer_forward.53} parent=1 // pred_region
      %67 = vsyncadd [#allocation3], 0
      %s68 = sshll.u32 [#allocation2], 4
      %s69 = int_to_ptr.vmem [resolvable:$true] %s68
      %s70 = sshll.u32 %s3, 4
      %s71 = int_to_ptr.hbm [resolvable:$true] %s70
      %76 = dma.vmem_to_hbm [thread:$0]  %s69, 256, %s71, [#allocation3], 128, 128, 8
    $region17: #{seq2seq_transformer_forward.53} parent=1 // pred_fallthru
      _
    // Predicated region
    $region18: #{seq2seq_transformer_forward.53} parent=1 // pred_check
      _
    $region19: #{seq2seq_transformer_forward.53} parent=1 // pred_check_branch
      %78 = sbr.rel (0) target = $region21
    $region20: #{seq2seq_transformer_forward.53} parent=1 // pred_region
      %80 = dma.done [#allocation3], 256
    $region21: #{seq2seq_transformer_forward.53} parent=1 // pred_fallthru
      _
    %81 = vsyncpa [#allocation3], 1

</llo_original>
